<compile_context>
chip_gen: v7x
topology: tpu7x:2x2x1
jax: 0.10.0
libtpu: 0.0.40
codegen_flags: <defaults>
</compile_context>

<pallas_src>
import functools

import numpy as np
import jax
import jax.numpy as jnp
from jax import lax
from jax.experimental import pallas as pl
from jax.experimental.pallas import tpu as pltpu


# ----------------------------- Pallas kernel -------------------------------


def _disc_opt_block_kernel(x_ref, w1_ref, b1_ref, w2_ref, b2_ref, combo_ref,
                           b0_ref, masks_ref, poolm_ref, out_ref,
                           taps1_ref, taps2_ref, pooled_ref,
                           *, H, W, block_n, pool_k):
    HW = H * W
    L = block_n * HW                 # lanes: block_n images, row-major (h, w)
    Ho, Wo = H // 2, W // 2

    x = x_ref[0]                     # (Cin, L)

    def conv3x3(inp, taps_ref, wcat, bias):
        # inp: (C, L); wcat: (Cout, 9C); bias: (Cout, 1)
        c = inp.shape[0]
        for t in range(9):           # masked taps written straight into im2col scratch
            dy, dx = t // 3 - 1, t % 3 - 1
            d = dy * W + dx
            if d == 0:
                taps_ref[t * c:(t + 1) * c, :] = inp
            else:
                # roll + border mask == zero-padded 3x3 tap; the masks also
                # zero cross-image / wrap-around taps of the folded lane axis.
                shifted = pltpu.roll(inp, shift=(-d) % L, axis=1)
                taps_ref[t * c:(t + 1) * c, :] = shifted * masks_ref[t:t + 1, :]
        # NOTE(perf, v6e/v7x): at very small Cout the MXU streams few LHS rows
        # per RHS reload; a VPU broadcast-FMA conv would win there.  Realistic
        # SAGAN widths (Cout >= 64) keep the MXU path the right choice.
        return jnp.dot(wcat, taps_ref[...],
                       preferred_element_type=jnp.float32) + bias

    # ---- main path: conv1 + ReLU, conv2 ------------------------------------
    h1 = jnp.maximum(conv3x3(x, taps1_ref, w1_ref[...], b1_ref[...]), 0.0)
    h2 = conv3x3(h1, taps2_ref, w2_ref[...], b2_ref[...])

    # ---- fused 2x2 average pool of [h2 ; x] (main + residual inputs) -------
    y = jnp.concatenate([h2, x], axis=0)               # (Cout+Cin, L)
    gwi = pool_k * 2 * W                               # lanes in per group
    gwo = pool_k * Wo                                  # lanes out per group
    n_groups = (block_n * Ho) // pool_k
    poolm = poolm_ref[...]                             # (gwi, gwo) block-diag
    if n_groups == 1:
        pooled = jnp.dot(y, poolm, preferred_element_type=jnp.float32)
    else:
        for g in range(n_groups):                      # lane-aligned slices/stores
            pooled_ref[:, g * gwo:(g + 1) * gwo] = jnp.dot(
                y[:, g * gwi:(g + 1) * gwi], poolm,
                preferred_element_type=jnp.float32)
        pooled = pooled_ref[...]

    # ---- out = pooled_main + w0 @ pooled_x + b0 == [I | w0] @ pooled + b0 ---
    out_ref[0] = jnp.dot(combo_ref[...], pooled,
                         preferred_element_type=jnp.float32) + b0_ref[...]


# ----------------------------- constant builders ----------------------------


def _border_masks(H, W, block_n):
    """(9, L) f32 validity masks for the 3x3 taps (zero-padding semantics)."""
    HW = H * W
    L = block_n * HW
    pos = np.arange(L)
    hh = (pos % HW) // W
    ww = pos % W
    m = np.ones((9, L), np.float32)
    for t in range(9):
        dy, dx = t // 3 - 1, t % 3 - 1
        valid = np.ones(L, bool)
        if dy != 0:
            valid &= (hh + dy >= 0) & (hh + dy <= H - 1)
        if dx != 0:
            valid &= (ww + dx >= 0) & (ww + dx <= W - 1)
        m[t] = valid.astype(np.float32)
    return m


def _pool_matrix(W, k):
    """Block-diagonal 2x2-average matrix over k consecutive two-row windows."""
    Wo = W // 2
    m = np.zeros((k * 2 * W, k * Wo), np.float32)
    for j in range(k):
        for wo in range(Wo):
            for r in range(2):
                for c in range(2):
                    m[j * 2 * W + r * W + 2 * wo + c, j * Wo + wo] = 0.25
    return m


def _pick_pool_group(total_windows, Wo):
    divs = [d for d in range(1, total_windows + 1) if total_windows % d == 0]
    for d in divs:                     # smallest group with 128-lane-dense output
        if (d * Wo) % 128 == 0:
            return d
    for d in divs:                     # else at least 128 output lanes
        if d * Wo >= 128:
            return d
    return total_windows               # small images: one group for everything


# ----------------------------- wrapper --------------------------------------


@functools.partial(jax.jit, static_argnames=("block_n",))
def disc_opt_block_pallas(x_nchw, params, block_n=None):
    w1, b1, w2, b2, w0, b0 = params
    N, Cin, H, W = x_nchw.shape
    Cout = w1.shape[0]
    assert H % 2 == 0 and W % 2 == 0, "AvgPool2d(2) requires even H, W"
    HW, HWo = H * W, (H // 2) * (W // 2)
    Ho, Wo = H // 2, W // 2

    def vmem_bytes(bn):
        # generous estimate of live f32 VMEM per grid step
        lb = bn * HW
        k = _pick_pool_group(bn * Ho, Wo)
        words = (2 * Cin * lb                 # x block (double-buffered)
                 + 2 * Cout * bn * HWo        # out block (double-buffered)
                 + 9 * Cin * lb               # conv1 im2col scratch
                 + 9 * Cout * lb              # conv2 im2col scratch
                 + (Cout + Cin) * bn * HWo    # pooled scratch
                 + (3 * Cout + Cin) * lb      # h1 / h2 / y / rolled tap
                 + 2 * 9 * lb                 # border masks
                 + 2 * (k * 2 * W) * (k * Wo)  # pool matrix
                 + 2 * (9 * Cin * Cout + 9 * Cout * Cout
                        + Cout * (Cout + Cin) + 3 * Cout))
        return 4 * words, k

    if block_n is None:
        # Fold a few images into the lane axis (amortizes ~0.35us/step, widens
        # matmul N / output stores) but keep G = N/block_n >= 2 grid steps so
        # v7x's two TensorCores can split the "parallel" axis and cross-step
        # pipelining exists at all.  Prefer a lane-dense (128-mult) output.
        cap = max(1, 2048 // HW)
        divs = [d for d in range(1, min(N, cap) + 1) if N % d == 0]
        eligible = [d for d in divs if N // d >= 2] or divs
        dense = [d for d in eligible if (d * HWo) % 128 == 0]
        block_n = max(dense) if dense else max(eligible)

    # Explicit VMEM budgeting: shrink block_n until the estimate fits v7x's
    # 64 MiB physical / 32 MiB scoped-default VMEM with headroom.
    # (For images too large even at block_n=1, a row-blocked grid axis with a
    #  1-row halo would be the next step; not needed at these shapes.)
    budget = 24 << 20
    est, pool_k = vmem_bytes(block_n)
    while est > budget and block_n > 1:
        block_n = max(d for d in range(1, block_n) if N % d == 0)
        est, pool_k = vmem_bytes(block_n)
    vmem_limit = int(min(max(2 * est, 32 << 20), 64 << 20))

    # pad the batch so the grid tiles exactly (no-op when block_n | N)
    Npad = -(-N // block_n) * block_n
    if Npad != N:
        x_nchw = jnp.concatenate(
            [x_nchw, jnp.zeros((Npad - N, Cin, H, W), x_nchw.dtype)], axis=0)
    G = Npad // block_n
    L = block_n * HW

    # fused per-tap weight matrices, [tap-major, in-channel-minor] to match the
    # kernel's im2col scratch layout
    w1cat = jnp.transpose(w1, (0, 2, 3, 1)).reshape(Cout, 9 * Cin)
    w2cat = jnp.transpose(w2, (0, 2, 3, 1)).reshape(Cout, 9 * Cout)
    w0m = w0[:, :, 0, 0]                                        # (Cout, Cin)
    combo = jnp.concatenate([jnp.eye(Cout, dtype=jnp.float32), w0m], axis=1)
    b1c = b1.reshape(Cout, 1)
    b2c = b2.reshape(Cout, 1)
    b0c = b0.reshape(Cout, 1)

    # grid-invariant constants, hoisted out of the kernel
    masks = jnp.asarray(_border_masks(H, W, block_n))           # (9, L)
    poolm = jnp.asarray(_pool_matrix(W, pool_k))                # (k*2W, k*Wo)

    # NCHW -> (G, Cin, block_n*HW): flattened spatial (+ folded images) on lanes
    x_fold = (x_nchw.reshape(G, block_n, Cin, HW)
              .transpose(0, 2, 1, 3)
              .reshape(G, Cin, L))

    kernel = functools.partial(_disc_opt_block_kernel,
                               H=H, W=W, block_n=block_n, pool_k=pool_k)
    out = pl.pallas_call(
        kernel,
        out_shape=jax.ShapeDtypeStruct((G, Cout, block_n * HWo), jnp.float32),
        grid=(G,),
        in_specs=[
            pl.BlockSpec((1, Cin, L), lambda g: (g, 0, 0)),              # x (folded)
            pl.BlockSpec((Cout, 9 * Cin), lambda g: (0, 0)),             # w1 taps
            pl.BlockSpec((Cout, 1), lambda g: (0, 0)),                   # b1
            pl.BlockSpec((Cout, 9 * Cout), lambda g: (0, 0)),            # w2 taps
            pl.BlockSpec((Cout, 1), lambda g: (0, 0)),                   # b2
            pl.BlockSpec((Cout, Cout + Cin), lambda g: (0, 0)),          # [I | w0]
            pl.BlockSpec((Cout, 1), lambda g: (0, 0)),                   # b0
            pl.BlockSpec((9, L), lambda g: (0, 0)),                      # border masks
            pl.BlockSpec((pool_k * 2 * W, pool_k * Wo), lambda g: (0, 0)),  # pool mat
        ],
        out_specs=pl.BlockSpec((1, Cout, block_n * HWo), lambda g: (g, 0, 0)),
        scratch_shapes=[
            pltpu.VMEM((9 * Cin, L), jnp.float32),                       # conv1 im2col
            pltpu.VMEM((9 * Cout, L), jnp.float32),                      # conv2 im2col
            pltpu.VMEM((Cout + Cin, block_n * HWo), jnp.float32),        # pooled groups
        ],
        compiler_params=pltpu.CompilerParams(
            dimension_semantics=("parallel",),                           # batch blocks
            vmem_limit_bytes=vmem_limit),
    )(x_fold, w1cat, b1c, w2cat, b2c, combo, b0c, masks, poolm)

    # (G, Cout, block_n*HWo) -> NCHW
    out = (out.reshape(G, Cout, block_n, HWo)
           .transpose(0, 2, 1, 3)
           .reshape(Npad, Cout, Ho, Wo))
    return out[:N]


# ----------------------------- glue: spectral norm --------------------------


def spectral_normalize(w, key, n_iters=3, eps=1e-12):
    """W / sigma(W) -- forward effect of torch spectral_norm (deterministic
    power iteration; synthetic params, no checkpoint to match)."""
    o = w.shape[0]
    m = w.reshape(o, -1)
    u = jax.random.normal(key, (o,), dtype=w.dtype)
    u = u / (jnp.linalg.norm(u) + eps)
    v = None
    for _ in range(n_iters):
        v = m.T @ u
        v = v / (jnp.linalg.norm(v) + eps)
        u = m @ v
        u = u / (jnp.linalg.norm(u) + eps)
    sigma = u @ (m @ v)
    return w / sigma


# ----------------------------- pure-JAX reference ---------------------------


def _conv_nchw(x, w, b, pad):
    y = lax.conv_general_dilated(
        x, w, window_strides=(1, 1),
        padding=[(pad, pad), (pad, pad)],
        dimension_numbers=("NCHW", "OIHW", "NCHW"))
    return y + b[None, :, None, None]


def _avgpool2(x):
    N, C, H, W = x.shape
    return x.reshape(N, C, H // 2, 2, W // 2, 2).mean(axis=(3, 5))


def disc_opt_block_ref(x, params):
    w1, b1, w2, b2, w0, b0 = params
    h = jax.nn.relu(_conv_nchw(x, w1, b1, 1))
    h = _conv_nchw(h, w2, b2, 1)
    h = _avgpool2(h)
    x0 = _avgpool2(x)
    x0 = _conv_nchw(x0, w0, b0, 0)
    return h + x0


# ----------------------------------- main -----------------------------------

if __name__ == "__main__":
    key = jax.random.PRNGKey(0)
    kx, k1, k2, k0, kb1, kb2, kb0, ku1, ku2, ku0 = jax.random.split(key, 10)

    N, Cin, Cout, H, W = 2, 4, 8, 16, 16

    x = jax.random.normal(kx, (N, Cin, H, W), dtype=jnp.float32)

    w1 = jax.random.normal(k1, (Cout, Cin, 3, 3), jnp.float32) * 0.1
    w2 = jax.random.normal(k2, (Cout, Cout, 3, 3), jnp.float32) * 0.1
    w0 = jax.random.normal(k0, (Cout, Cin, 1, 1), jnp.float32) * 0.1
    b1 = jax.random.normal(kb1, (Cout,), jnp.float32) * 0.1
    b2 = jax.random.normal(kb2, (Cout,), jnp.float32) * 0.1
    b0 = jax.random.normal(kb0, (Cout,), jnp.float32) * 0.1

    # spectral_norm(conv) -> use W / sigma(W) in the forward pass (one-time setup)
    w1 = spectral_normalize(w1, ku1)
    w2 = spectral_normalize(w2, ku2)
    w0 = spectral_normalize(w0, ku0)

    params = (w1, b1, w2, b2, w0, b0)

    out = disc_opt_block_pallas(x, params)
    out = jax.block_until_ready(out)

    ref = disc_opt_block_ref(x, params)
    assert out.shape == (N, Cout, H // 2, W // 2)
    np.testing.assert_allclose(np.asarray(out), np.asarray(ref),
                               rtol=5e-4, atol=5e-4)

    print("KERNEL_OK")
</pallas_src>

<mosaic_0001>
module attributes {stable_mosaic.version = 11 : i64} {
  func.func @_disc_opt_block_kernel(%arg0: i32, %arg1: memref<1x4x256xf32, #tpu.memory_space<vmem>>, %arg2: memref<8x36xf32, #tpu.memory_space<vmem>>, %arg3: memref<8x1xf32, #tpu.memory_space<vmem>>, %arg4: memref<8x72xf32, #tpu.memory_space<vmem>>, %arg5: memref<8x1xf32, #tpu.memory_space<vmem>>, %arg6: memref<8x12xf32, #tpu.memory_space<vmem>>, %arg7: memref<8x1xf32, #tpu.memory_space<vmem>>, %arg8: memref<9x256xf32, #tpu.memory_space<vmem>>, %arg9: memref<256x64xf32, #tpu.memory_space<vmem>>, %arg10: memref<1x8x64xf32, #tpu.memory_space<vmem>>, %arg11: memref<36x256xf32, #tpu.memory_space<vmem>>, %arg12: memref<72x256xf32, #tpu.memory_space<vmem>>, %arg13: memref<12x64xf32, #tpu.memory_space<vmem>>) attributes {dimension_semantics = [#tpu.dimension_semantics<parallel>], iteration_bounds = array<i64: 2>, scalar_prefetch = 0 : i64, scratch_operands = 3 : i64, tpu.core_type = #tpu.core_type<tc>, window_params = [{transform_indices = @transform_0, window_bounds = array<i64: 1, 4, 256>}, {pipeline_mode = #tpu.pipeline_mode<synchronous>, transform_indices = @transform_1, window_bounds = array<i64: 8, 36>}, {pipeline_mode = #tpu.pipeline_mode<synchronous>, transform_indices = @transform_2, window_bounds = array<i64: 8, 1>}, {pipeline_mode = #tpu.pipeline_mode<synchronous>, transform_indices = @transform_3, window_bounds = array<i64: 8, 72>}, {pipeline_mode = #tpu.pipeline_mode<synchronous>, transform_indices = @transform_4, window_bounds = array<i64: 8, 1>}, {pipeline_mode = #tpu.pipeline_mode<synchronous>, transform_indices = @transform_5, window_bounds = array<i64: 8, 12>}, {pipeline_mode = #tpu.pipeline_mode<synchronous>, transform_indices = @transform_6, window_bounds = array<i64: 8, 1>}, {pipeline_mode = #tpu.pipeline_mode<synchronous>, transform_indices = @transform_7, window_bounds = array<i64: 9, 256>}, {pipeline_mode = #tpu.pipeline_mode<synchronous>, transform_indices = @transform_8, window_bounds = array<i64: 256, 64>}, {transform_indices = @transform_9, window_bounds = array<i64: 1, 8, 64>}]} {
    %c0 = arith.constant 0 : index
    %c0_0 = arith.constant 0 : index
    %c0_1 = arith.constant 0 : index
    %0 = vector.load %arg1[%c0, %c0_0, %c0_1] : memref<1x4x256xf32, #tpu.memory_space<vmem>>, vector<1x4x256xf32>
    %1 = vector.shape_cast %0 : vector<1x4x256xf32> to vector<4x256xf32>
    %c0_2 = arith.constant 0 : index
    %c0_3 = arith.constant 0 : index
    %2 = vector.load %arg2[%c0_2, %c0_3] : memref<8x36xf32, #tpu.memory_space<vmem>>, vector<8x36xf32>
    %c0_4 = arith.constant 0 : index
    %c0_5 = arith.constant 0 : index
    %3 = vector.load %arg3[%c0_4, %c0_5] : memref<8x1xf32, #tpu.memory_space<vmem>>, vector<8x1xf32>
    %c17_i32 = arith.constant 17 : i32
    %4 = tpu.dynamic_rotate %1 by %c17_i32 dim 1 : vector<4x256xf32>, i32 -> vector<4x256xf32>
    %c0_6 = arith.constant 0 : index
    %c0_7 = arith.constant 0 : index
    %5 = vector.load %arg8[%c0_6, %c0_7] : memref<9x256xf32, #tpu.memory_space<vmem>>, vector<1x256xf32>
    %6 = vector.broadcast %5 : vector<1x256xf32> to vector<4x256xf32>
    %7 = arith.mulf %4, %6 : vector<4x256xf32>
    %c0_8 = arith.constant 0 : index
    %c0_9 = arith.constant 0 : index
    %8 = vector.load %arg11[%c0_8, %c0_9] : memref<36x256xf32, #tpu.memory_space<vmem>>, vector<4x256xf32>
    tpu.vector_store %arg11[%c0_8, %c0_9], %7 {strides = array<i32>} : memref<36x256xf32, #tpu.memory_space<vmem>>, vector<4x256xf32>,
    %c16_i32 = arith.constant 16 : i32
    %9 = tpu.dynamic_rotate %1 by %c16_i32 dim 1 : vector<4x256xf32>, i32 -> vector<4x256xf32>
    %c1 = arith.constant 1 : index
    %c0_10 = arith.constant 0 : index
    %10 = vector.load %arg8[%c1, %c0_10] : memref<9x256xf32, #tpu.memory_space<vmem>>, vector<1x256xf32>
    %11 = vector.broadcast %10 : vector<1x256xf32> to vector<4x256xf32>
    %12 = arith.mulf %9, %11 : vector<4x256xf32>
    %c4 = arith.constant 4 : index
    %c0_11 = arith.constant 0 : index
    %13 = vector.load %arg11[%c4, %c0_11] : memref<36x256xf32, #tpu.memory_space<vmem>>, vector<4x256xf32>
    tpu.vector_store %arg11[%c4, %c0_11], %12 {strides = array<i32>} : memref<36x256xf32, #tpu.memory_space<vmem>>, vector<4x256xf32>,
    %c15_i32 = arith.constant 15 : i32
    %14 = tpu.dynamic_rotate %1 by %c15_i32 dim 1 : vector<4x256xf32>, i32 -> vector<4x256xf32>
    %c2 = arith.constant 2 : index
    %c0_12 = arith.constant 0 : index
    %15 = vector.load %arg8[%c2, %c0_12] : memref<9x256xf32, #tpu.memory_space<vmem>>, vector<1x256xf32>
    %16 = vector.broadcast %15 : vector<1x256xf32> to vector<4x256xf32>
    %17 = arith.mulf %14, %16 : vector<4x256xf32>
    %c8 = arith.constant 8 : index
    %c0_13 = arith.constant 0 : index
    %18 = vector.load %arg11[%c8, %c0_13] : memref<36x256xf32, #tpu.memory_space<vmem>>, vector<4x256xf32>
    tpu.vector_store %arg11[%c8, %c0_13], %17 {strides = array<i32>} : memref<36x256xf32, #tpu.memory_space<vmem>>, vector<4x256xf32>,
    %c1_i32 = arith.constant 1 : i32
    %19 = tpu.dynamic_rotate %1 by %c1_i32 dim 1 : vector<4x256xf32>, i32 -> vector<4x256xf32>
    %c3 = arith.constant 3 : index
    %c0_14 = arith.constant 0 : index
    %20 = vector.load %arg8[%c3, %c0_14] : memref<9x256xf32, #tpu.memory_space<vmem>>, vector<1x256xf32>
    %21 = vector.broadcast %20 : vector<1x256xf32> to vector<4x256xf32>
    %22 = arith.mulf %19, %21 : vector<4x256xf32>
    %c12 = arith.constant 12 : index
    %c0_15 = arith.constant 0 : index
    %23 = vector.load %arg11[%c12, %c0_15] : memref<36x256xf32, #tpu.memory_space<vmem>>, vector<4x256xf32>
    tpu.vector_store %arg11[%c12, %c0_15], %22 {strides = array<i32>} : memref<36x256xf32, #tpu.memory_space<vmem>>, vector<4x256xf32>,
    %c16 = arith.constant 16 : index
    %c0_16 = arith.constant 0 : index
    %24 = vector.load %arg11[%c16, %c0_16] : memref<36x256xf32, #tpu.memory_space<vmem>>, vector<4x256xf32>
    tpu.vector_store %arg11[%c16, %c0_16], %1 {strides = array<i32>} : memref<36x256xf32, #tpu.memory_space<vmem>>, vector<4x256xf32>,
    %c255_i32 = arith.constant 255 : i32
    %25 = tpu.dynamic_rotate %1 by %c255_i32 dim 1 : vector<4x256xf32>, i32 -> vector<4x256xf32>
    %c5 = arith.constant 5 : index
    %c0_17 = arith.constant 0 : index
    %26 = vector.load %arg8[%c5, %c0_17] : memref<9x256xf32, #tpu.memory_space<vmem>>, vector<1x256xf32>
    %27 = vector.broadcast %26 : vector<1x256xf32> to vector<4x256xf32>
    %28 = arith.mulf %25, %27 : vector<4x256xf32>
    %c20 = arith.constant 20 : index
    %c0_18 = arith.constant 0 : index
    %29 = vector.load %arg11[%c20, %c0_18] : memref<36x256xf32, #tpu.memory_space<vmem>>, vector<4x256xf32>
    tpu.vector_store %arg11[%c20, %c0_18], %28 {strides = array<i32>} : memref<36x256xf32, #tpu.memory_space<vmem>>, vector<4x256xf32>,
    %c241_i32 = arith.constant 241 : i32
    %30 = tpu.dynamic_rotate %1 by %c241_i32 dim 1 : vector<4x256xf32>, i32 -> vector<4x256xf32>
    %c6 = arith.constant 6 : index
    %c0_19 = arith.constant 0 : index
    %31 = vector.load %arg8[%c6, %c0_19] : memref<9x256xf32, #tpu.memory_space<vmem>>, vector<1x256xf32>
    %32 = vector.broadcast %31 : vector<1x256xf32> to vector<4x256xf32>
    %33 = arith.mulf %30, %32 : vector<4x256xf32>
    %c24 = arith.constant 24 : index
    %c0_20 = arith.constant 0 : index
    %34 = vector.load %arg11[%c24, %c0_20] : memref<36x256xf32, #tpu.memory_space<vmem>>, vector<4x256xf32>
    tpu.vector_store %arg11[%c24, %c0_20], %33 {strides = array<i32>} : memref<36x256xf32, #tpu.memory_space<vmem>>, vector<4x256xf32>,
    %c240_i32 = arith.constant 240 : i32
    %35 = tpu.dynamic_rotate %1 by %c240_i32 dim 1 : vector<4x256xf32>, i32 -> vector<4x256xf32>
    %c7 = arith.constant 7 : index
    %c0_21 = arith.constant 0 : index
    %36 = vector.load %arg8[%c7, %c0_21] : memref<9x256xf32, #tpu.memory_space<vmem>>, vector<1x256xf32>
    %37 = vector.broadcast %36 : vector<1x256xf32> to vector<4x256xf32>
    %38 = arith.mulf %35, %37 : vector<4x256xf32>
    %c28 = arith.constant 28 : index
    %c0_22 = arith.constant 0 : index
    %39 = vector.load %arg11[%c28, %c0_22] : memref<36x256xf32, #tpu.memory_space<vmem>>, vector<4x256xf32>
    tpu.vector_store %arg11[%c28, %c0_22], %38 {strides = array<i32>} : memref<36x256xf32, #tpu.memory_space<vmem>>, vector<4x256xf32>,
    %c239_i32 = arith.constant 239 : i32
    %40 = tpu.dynamic_rotate %1 by %c239_i32 dim 1 : vector<4x256xf32>, i32 -> vector<4x256xf32>
    %c8_23 = arith.constant 8 : index
    %c0_24 = arith.constant 0 : index
    %41 = vector.load %arg8[%c8_23, %c0_24] : memref<9x256xf32, #tpu.memory_space<vmem>>, vector<1x256xf32>
    %42 = vector.broadcast %41 : vector<1x256xf32> to vector<4x256xf32>
    %43 = arith.mulf %40, %42 : vector<4x256xf32>
    %c32 = arith.constant 32 : index
    %c0_25 = arith.constant 0 : index
    %44 = vector.load %arg11[%c32, %c0_25] : memref<36x256xf32, #tpu.memory_space<vmem>>, vector<4x256xf32>
    tpu.vector_store %arg11[%c32, %c0_25], %43 {strides = array<i32>} : memref<36x256xf32, #tpu.memory_space<vmem>>, vector<4x256xf32>,
    %c0_26 = arith.constant 0 : index
    %c0_27 = arith.constant 0 : index
    %45 = vector.load %arg11[%c0_26, %c0_27] : memref<36x256xf32, #tpu.memory_space<vmem>>, vector<36x256xf32>
    %cst = arith.constant dense<0.000000e+00> : vector<8x256xf32>
    %46 = tpu.matmul %2, %45, %cst {dimension_numbers = #tpu.dot_dimension_numbers<[1], [0], [0], [1], [0, 0, 1, 1], [], []>} : vector<8x36xf32>, vector<36x256xf32>, vector<8x256xf32> -> vector<8x256xf32>
    %47 = vector.broadcast %3 : vector<8x1xf32> to vector<8x256xf32>
    %48 = arith.addf %46, %47 : vector<8x256xf32>
    %cst_28 = arith.constant 0.000000e+00 : f32
    %49 = vector.broadcast %cst_28 : f32 to vector<8x256xf32>
    %50 = arith.maximumf %48, %49 : vector<8x256xf32>
    %c0_29 = arith.constant 0 : index
    %c0_30 = arith.constant 0 : index
    %51 = vector.load %arg4[%c0_29, %c0_30] : memref<8x72xf32, #tpu.memory_space<vmem>>, vector<8x72xf32>
    %c0_31 = arith.constant 0 : index
    %c0_32 = arith.constant 0 : index
    %52 = vector.load %arg5[%c0_31, %c0_32] : memref<8x1xf32, #tpu.memory_space<vmem>>, vector<8x1xf32>
    %c17_i32_33 = arith.constant 17 : i32
    %53 = tpu.dynamic_rotate %50 by %c17_i32_33 dim 1 : vector<8x256xf32>, i32 -> vector<8x256xf32>
    %c0_34 = arith.constant 0 : index
    %c0_35 = arith.constant 0 : index
    %54 = vector.load %arg8[%c0_34, %c0_35] : memref<9x256xf32, #tpu.memory_space<vmem>>, vector<1x256xf32>
    %55 = vector.broadcast %54 : vector<1x256xf32> to vector<8x256xf32>
    %56 = arith.mulf %53, %55 : vector<8x256xf32>
    %c0_36 = arith.constant 0 : index
    %c0_37 = arith.constant 0 : index
    %57 = vector.load %arg12[%c0_36, %c0_37] : memref<72x256xf32, #tpu.memory_space<vmem>>, vector<8x256xf32>
    tpu.vector_store %arg12[%c0_36, %c0_37], %56 {strides = array<i32>} : memref<72x256xf32, #tpu.memory_space<vmem>>, vector<8x256xf32>,
    %c16_i32_38 = arith.constant 16 : i32
    %58 = tpu.dynamic_rotate %50 by %c16_i32_38 dim 1 : vector<8x256xf32>, i32 -> vector<8x256xf32>
    %c1_39 = arith.constant 1 : index
    %c0_40 = arith.constant 0 : index
    %59 = vector.load %arg8[%c1_39, %c0_40] : memref<9x256xf32, #tpu.memory_space<vmem>>, vector<1x256xf32>
    %60 = vector.broadcast %59 : vector<1x256xf32> to vector<8x256xf32>
    %61 = arith.mulf %58, %60 : vector<8x256xf32>
    %c8_41 = arith.constant 8 : index
    %c0_42 = arith.constant 0 : index
    %62 = vector.load %arg12[%c8_41, %c0_42] : memref<72x256xf32, #tpu.memory_space<vmem>>, vector<8x256xf32>
    tpu.vector_store %arg12[%c8_41, %c0_42], %61 {strides = array<i32>} : memref<72x256xf32, #tpu.memory_space<vmem>>, vector<8x256xf32>,
    %c15_i32_43 = arith.constant 15 : i32
    %63 = tpu.dynamic_rotate %50 by %c15_i32_43 dim 1 : vector<8x256xf32>, i32 -> vector<8x256xf32>
    %c2_44 = arith.constant 2 : index
    %c0_45 = arith.constant 0 : index
    %64 = vector.load %arg8[%c2_44, %c0_45] : memref<9x256xf32, #tpu.memory_space<vmem>>, vector<1x256xf32>
    %65 = vector.broadcast %64 : vector<1x256xf32> to vector<8x256xf32>
    %66 = arith.mulf %63, %65 : vector<8x256xf32>
    %c16_46 = arith.constant 16 : index
    %c0_47 = arith.constant 0 : index
    %67 = vector.load %arg12[%c16_46, %c0_47] : memref<72x256xf32, #tpu.memory_space<vmem>>, vector<8x256xf32>
    tpu.vector_store %arg12[%c16_46, %c0_47], %66 {strides = array<i32>} : memref<72x256xf32, #tpu.memory_space<vmem>>, vector<8x256xf32>,
    %c1_i32_48 = arith.constant 1 : i32
    %68 = tpu.dynamic_rotate %50 by %c1_i32_48 dim 1 : vector<8x256xf32>, i32 -> vector<8x256xf32>
    %c3_49 = arith.constant 3 : index
    %c0_50 = arith.constant 0 : index
    %69 = vector.load %arg8[%c3_49, %c0_50] : memref<9x256xf32, #tpu.memory_space<vmem>>, vector<1x256xf32>
    %70 = vector.broadcast %69 : vector<1x256xf32> to vector<8x256xf32>
    %71 = arith.mulf %68, %70 : vector<8x256xf32>
    %c24_51 = arith.constant 24 : index
    %c0_52 = arith.constant 0 : index
    %72 = vector.load %arg12[%c24_51, %c0_52] : memref<72x256xf32, #tpu.memory_space<vmem>>, vector<8x256xf32>
    tpu.vector_store %arg12[%c24_51, %c0_52], %71 {strides = array<i32>} : memref<72x256xf32, #tpu.memory_space<vmem>>, vector<8x256xf32>,
    %c32_53 = arith.constant 32 : index
    %c0_54 = arith.constant 0 : index
    %73 = vector.load %arg12[%c32_53, %c0_54] : memref<72x256xf32, #tpu.memory_space<vmem>>, vector<8x256xf32>
    tpu.vector_store %arg12[%c32_53, %c0_54], %50 {strides = array<i32>} : memref<72x256xf32, #tpu.memory_space<vmem>>, vector<8x256xf32>,
    %c255_i32_55 = arith.constant 255 : i32
    %74 = tpu.dynamic_rotate %50 by %c255_i32_55 dim 1 : vector<8x256xf32>, i32 -> vector<8x256xf32>
    %c5_56 = arith.constant 5 : index
    %c0_57 = arith.constant 0 : index
    %75 = vector.load %arg8[%c5_56, %c0_57] : memref<9x256xf32, #tpu.memory_space<vmem>>, vector<1x256xf32>
    %76 = vector.broadcast %75 : vector<1x256xf32> to vector<8x256xf32>
    %77 = arith.mulf %74, %76 : vector<8x256xf32>
    %c40 = arith.constant 40 : index
    %c0_58 = arith.constant 0 : index
    %78 = vector.load %arg12[%c40, %c0_58] : memref<72x256xf32, #tpu.memory_space<vmem>>, vector<8x256xf32>
    tpu.vector_store %arg12[%c40, %c0_58], %77 {strides = array<i32>} : memref<72x256xf32, #tpu.memory_space<vmem>>, vector<8x256xf32>,
    %c241_i32_59 = arith.constant 241 : i32
    %79 = tpu.dynamic_rotate %50 by %c241_i32_59 dim 1 : vector<8x256xf32>, i32 -> vector<8x256xf32>
    %c6_60 = arith.constant 6 : index
    %c0_61 = arith.constant 0 : index
    %80 = vector.load %arg8[%c6_60, %c0_61] : memref<9x256xf32, #tpu.memory_space<vmem>>, vector<1x256xf32>
    %81 = vector.broadcast %80 : vector<1x256xf32> to vector<8x256xf32>
    %82 = arith.mulf %79, %81 : vector<8x256xf32>
    %c48 = arith.constant 48 : index
    %c0_62 = arith.constant 0 : index
    %83 = vector.load %arg12[%c48, %c0_62] : memref<72x256xf32, #tpu.memory_space<vmem>>, vector<8x256xf32>
    tpu.vector_store %arg12[%c48, %c0_62], %82 {strides = array<i32>} : memref<72x256xf32, #tpu.memory_space<vmem>>, vector<8x256xf32>,
    %c240_i32_63 = arith.constant 240 : i32
    %84 = tpu.dynamic_rotate %50 by %c240_i32_63 dim 1 : vector<8x256xf32>, i32 -> vector<8x256xf32>
    %c7_64 = arith.constant 7 : index
    %c0_65 = arith.constant 0 : index
    %85 = vector.load %arg8[%c7_64, %c0_65] : memref<9x256xf32, #tpu.memory_space<vmem>>, vector<1x256xf32>
    %86 = vector.broadcast %85 : vector<1x256xf32> to vector<8x256xf32>
    %87 = arith.mulf %84, %86 : vector<8x256xf32>
    %c56 = arith.constant 56 : index
    %c0_66 = arith.constant 0 : index
    %88 = vector.load %arg12[%c56, %c0_66] : memref<72x256xf32, #tpu.memory_space<vmem>>, vector<8x256xf32>
    tpu.vector_store %arg12[%c56, %c0_66], %87 {strides = array<i32>} : memref<72x256xf32, #tpu.memory_space<vmem>>, vector<8x256xf32>,
    %c239_i32_67 = arith.constant 239 : i32
    %89 = tpu.dynamic_rotate %50 by %c239_i32_67 dim 1 : vector<8x256xf32>, i32 -> vector<8x256xf32>
    %c8_68 = arith.constant 8 : index
    %c0_69 = arith.constant 0 : index
    %90 = vector.load %arg8[%c8_68, %c0_69] : memref<9x256xf32, #tpu.memory_space<vmem>>, vector<1x256xf32>
    %91 = vector.broadcast %90 : vector<1x256xf32> to vector<8x256xf32>
    %92 = arith.mulf %89, %91 : vector<8x256xf32>
    %c64 = arith.constant 64 : index
    %c0_70 = arith.constant 0 : index
    %93 = vector.load %arg12[%c64, %c0_70] : memref<72x256xf32, #tpu.memory_space<vmem>>, vector<8x256xf32>
    tpu.vector_store %arg12[%c64, %c0_70], %92 {strides = array<i32>} : memref<72x256xf32, #tpu.memory_space<vmem>>, vector<8x256xf32>,
    %c0_71 = arith.constant 0 : index
    %c0_72 = arith.constant 0 : index
    %94 = vector.load %arg12[%c0_71, %c0_72] : memref<72x256xf32, #tpu.memory_space<vmem>>, vector<72x256xf32>
    %cst_73 = arith.constant dense<0.000000e+00> : vector<8x256xf32>
    %95 = tpu.matmul %51, %94, %cst_73 {dimension_numbers = #tpu.dot_dimension_numbers<[1], [0], [0], [1], [0, 0, 1, 1], [], []>} : vector<8x72xf32>, vector<72x256xf32>, vector<8x256xf32> -> vector<8x256xf32>
    %96 = vector.broadcast %52 : vector<8x1xf32> to vector<8x256xf32>
    %97 = arith.addf %95, %96 : vector<8x256xf32>
    %98 = tpu.concatenate %97, %1 in 0 : vector<8x256xf32>, vector<4x256xf32> -> vector<12x256xf32>
    %c0_74 = arith.constant 0 : index
    %c0_75 = arith.constant 0 : index
    %99 = vector.load %arg9[%c0_74, %c0_75] : memref<256x64xf32, #tpu.memory_space<vmem>>, vector<256x64xf32>
    %cst_76 = arith.constant dense<0.000000e+00> : vector<12x64xf32>
    %100 = tpu.matmul %98, %99, %cst_76 {dimension_numbers = #tpu.dot_dimension_numbers<[1], [0], [0], [1], [0, 0, 1, 1], [], []>} : vector<12x256xf32>, vector<256x64xf32>, vector<12x64xf32> -> vector<12x64xf32>
    %c0_77 = arith.constant 0 : index
    %c0_78 = arith.constant 0 : index
    %101 = vector.load %arg6[%c0_77, %c0_78] : memref<8x12xf32, #tpu.memory_space<vmem>>, vector<8x12xf32>
    %cst_79 = arith.constant dense<0.000000e+00> : vector<8x64xf32>
    %102 = tpu.matmul %101, %100, %cst_79 {dimension_numbers = #tpu.dot_dimension_numbers<[1], [0], [0], [1], [0, 0, 1, 1], [], []>} : vector<8x12xf32>, vector<12x64xf32>, vector<8x64xf32> -> vector<8x64xf32>
    %c0_80 = arith.constant 0 : index
    %c0_81 = arith.constant 0 : index
    %103 = vector.load %arg7[%c0_80, %c0_81] : memref<8x1xf32, #tpu.memory_space<vmem>>, vector<8x1xf32>
    %104 = vector.broadcast %103 : vector<8x1xf32> to vector<8x64xf32>
    %105 = arith.addf %102, %104 : vector<8x64xf32>
    %c0_82 = arith.constant 0 : index
    %c0_83 = arith.constant 0 : index
    %c0_84 = arith.constant 0 : index
    %106 = vector.load %arg10[%c0_82, %c0_83, %c0_84] : memref<1x8x64xf32, #tpu.memory_space<vmem>>, vector<1x8x64xf32>
    %107 = vector.shape_cast %106 : vector<1x8x64xf32> to vector<8x64xf32>
    %108 = vector.shape_cast %105 : vector<8x64xf32> to vector<1x8x64xf32>
    tpu.vector_store %arg10[%c0_82, %c0_83, %c0_84], %108 {strides = array<i32>} : memref<1x8x64xf32, #tpu.memory_space<vmem>>, vector<1x8x64xf32>,
    return
  }
  func.func @transform_0(%arg0: i32) -> (i32, i32, i32) {
    %c0_i32 = arith.constant 0 : i32
    %c0_i32_0 = arith.constant 0 : i32
    %c0_i32_1 = arith.constant 0 : i32
    return %arg0, %c0_i32, %c0_i32_0 : i32, i32, i32
  }
  func.func @transform_1(%arg0: i32) -> (i32, i32) {
    %c0_i32 = arith.constant 0 : i32
    %c0_i32_0 = arith.constant 0 : i32
    %c0_i32_1 = arith.constant 0 : i32
    return %c0_i32, %c0_i32_0 : i32, i32
  }
  func.func @transform_2(%arg0: i32) -> (i32, i32) {
    %c0_i32 = arith.constant 0 : i32
    %c0_i32_0 = arith.constant 0 : i32
    %c0_i32_1 = arith.constant 0 : i32
    return %c0_i32, %c0_i32_0 : i32, i32
  }
  func.func @transform_3(%arg0: i32) -> (i32, i32) {
    %c0_i32 = arith.constant 0 : i32
    %c0_i32_0 = arith.constant 0 : i32
    %c0_i32_1 = arith.constant 0 : i32
    return %c0_i32, %c0_i32_0 : i32, i32
  }
  func.func @transform_4(%arg0: i32) -> (i32, i32) {
    %c0_i32 = arith.constant 0 : i32
    %c0_i32_0 = arith.constant 0 : i32
    %c0_i32_1 = arith.constant 0 : i32
    return %c0_i32, %c0_i32_0 : i32, i32
  }
  func.func @transform_5(%arg0: i32) -> (i32, i32) {
    %c0_i32 = arith.constant 0 : i32
    %c0_i32_0 = arith.constant 0 : i32
    %c0_i32_1 = arith.constant 0 : i32
    return %c0_i32, %c0_i32_0 : i32, i32
  }
  func.func @transform_6(%arg0: i32) -> (i32, i32) {
    %c0_i32 = arith.constant 0 : i32
    %c0_i32_0 = arith.constant 0 : i32
    %c0_i32_1 = arith.constant 0 : i32
    return %c0_i32, %c0_i32_0 : i32, i32
  }
  func.func @transform_7(%arg0: i32) -> (i32, i32) {
    %c0_i32 = arith.constant 0 : i32
    %c0_i32_0 = arith.constant 0 : i32
    %c0_i32_1 = arith.constant 0 : i32
    return %c0_i32, %c0_i32_0 : i32, i32
  }
  func.func @transform_8(%arg0: i32) -> (i32, i32) {
    %c0_i32 = arith.constant 0 : i32
    %c0_i32_0 = arith.constant 0 : i32
    %c0_i32_1 = arith.constant 0 : i32
    return %c0_i32, %c0_i32_0 : i32, i32
  }
  func.func @transform_9(%arg0: i32) -> (i32, i32, i32) {
    %c0_i32 = arith.constant 0 : i32
    %c0_i32_0 = arith.constant 0 : i32
    %c0_i32_1 = arith.constant 0 : i32
    return %arg0, %c0_i32, %c0_i32_0 : i32, i32, i32
  }
}

</mosaic_0001>

<llo_original>
// kernel: disc_opt_block_pallas.1
$region0: #{disc_opt_block_pallas.1}
  #allocation0 [shape = 'u32[]', space=smem, size = 0x4, offset = 0x4, fixed_abs, tag = 'smem constant byte address 0x4 - core index']
  #allocation1 [shape = 'u32[144,128]{1,0:T(1,128)}', space=vmem, size = 0x12000, scoped, tag = 'internal scratch']
  #allocation2 [shape = 'f32[36,256]{1,0:T(8,128)}', space=vmem, size = 0xa000, scoped, tag = 'scratch operand']
  #allocation3 [shape = 'f32[72,256]{1,0:T(8,128)}', space=vmem, size = 0x12000, scoped, tag = 'scratch operand']
  #allocation4 [shape = 'f32[12,64]{1,0:T(8,128)}', space=vmem, size = 0x2000, scoped, tag = 'scratch operand']
  %s0 = inlined_call_operand.vmem [shape: f32[2,4,256], index: 0, kind: input, shape index: {}]
  %s1 = inlined_call_operand.vmem [shape: f32[8,36], index: 1, kind: input, shape index: {}]
  %s2 = inlined_call_operand.vmem [shape: f32[8,1], index: 2, kind: input, shape index: {}]
  %s3 = inlined_call_operand.vmem [shape: f32[8,72], index: 3, kind: input, shape index: {}]
  %s4 = inlined_call_operand.vmem [shape: f32[8,1], index: 4, kind: input, shape index: {}]
  %s5 = inlined_call_operand.vmem [shape: f32[8,12], index: 5, kind: input, shape index: {}]
  %s6 = inlined_call_operand.vmem [shape: f32[8,1], index: 6, kind: input, shape index: {}]
  %s7 = inlined_call_operand.vmem [shape: f32[9,256], index: 7, kind: input, shape index: {}]
  %s8 = inlined_call_operand.vmem [shape: f32[256,64], index: 8, kind: input, shape index: {}]
  %s9 = inlined_call_operand.vmem [shape: f32[2,8,64], index: 9, kind: output, shape index: {}]
  %s10 = sld [smem:[#allocation0]]
  $region69: #{disc_opt_block_pallas.1} parent=0
    _
  %s12 = ssub.s32 1, %s10
  %s13 = scalar_select 0, %s12, %s10
  loop: start=0, step=1, limit=4
  $region2: #{disc_opt_block_pallas.1} parent=0 // loop_pre_header
    _
  $region3: #{disc_opt_block_pallas.1} parent=0 // loop_header
    %s15 = sphi 0, %s19
    %p16 = scmp.ge.s32.totalorder %s15, 4
    %s25 = sphi 0, %s27
    %s28 = sphi 0, %s25
    %s29 = sphi 0, %s28
    %s45 = sphi 0, %s29
    %s49 = sphi 0, %s49
    %s51 = sphi 0, %s49
    %s52 = sphi 0, %s51
    %s66 = sphi 0, %s52
    %s70 = sphi 0, %s70
    %s72 = sphi 0, %s70
    %s73 = sphi 0, %s72
    %s87 = sphi 0, %s73
    %s91 = sphi 0, %s91
    %s93 = sphi 0, %s91
    %s94 = sphi 0, %s93
    %s108 = sphi 0, %s94
    %s112 = sphi 0, %s112
    %s114 = sphi 0, %s112
    %s115 = sphi 0, %s114
    %s129 = sphi 0, %s115
    %s133 = sphi 0, %s133
    %s135 = sphi 0, %s133
    %s136 = sphi 0, %s135
    %s150 = sphi 0, %s136
    %s154 = sphi 0, %s154
    %s156 = sphi 0, %s154
    %s157 = sphi 0, %s156
    %s171 = sphi 0, %s157
    %s175 = sphi 0, %s175
    %s177 = sphi 0, %s175
    %s178 = sphi 0, %s177
    %s192 = sphi 0, %s178
    %s196 = sphi 0, %s196
    %s198 = sphi 0, %s196
    %s199 = sphi 0, %s198
    %s213 = sphi 0, %s199
    %s219 = sphi 0, %s221
    %s222 = sphi 0, %s219
    %s223 = sphi 0, %s222
    %s239 = sphi 0, %s223
  $region4: #{disc_opt_block_pallas.1} parent=0 // loop_header_branch
    %18 = sbr.rel (%p16) target = $region8
  $region5: #{disc_opt_block_pallas.1} parent=0 // loop_body
    %s20 = ssub.s32 %s15, 1
    %s21 = ssub.s32 %s15, 2
    %s22 = sadd.s32 %s15, 1
    %s23 = ssub.s32 %s15, %s22
    %p24 = scmp.eq.s32.totalorder %s23, 0
    %s26 = sadd.s32 %s25, 1
    %s27 = scalar_select %p24, %s25, %s26
    %p30 = pneg %p24
    %p31 = scmp.eq.s32.totalorder %s15, 1
    %p32 = por %p30, %p31
    %p33 = scmp.ne.s32.totalorder %s25, %s28
    %p34 = scmp.eq.s32.totalorder %s15, 0
    %p35 = por %p33, %p34
    %p36 = scmp.ne.s32.totalorder %s25, %s28
    %p37 = scmp.eq.s32.totalorder %s20, 1
    %p38 = por %p36, %p37
    %p39 = scmp.ne.s32.totalorder %s28, %s29
    %p40 = scmp.eq.s32.totalorder %s20, 0
    %p41 = por %p39, %p40
    %p42 = scmp.ne.s32.totalorder %s28, %s29
    %p43 = scmp.eq.s32.totalorder %s21, 1
    %p44 = por %p42, %p43
    %p46 = scmp.ne.s32.totalorder %s29, %s45
    %p47 = scmp.eq.s32.totalorder %s21, 0
    %p48 = por %p46, %p47
    %s50 = sadd.s32 %s49, 1
    %p53 = scmp.eq.s32.totalorder %s15, 1
    %p54 = scmp.ne.s32.totalorder %s49, %s51
    %p55 = scmp.eq.s32.totalorder %s15, 0
    %p56 = por %p54, %p55
    %p57 = scmp.ne.s32.totalorder %s49, %s51
    %p58 = scmp.eq.s32.totalorder %s20, 1
    %p59 = por %p57, %p58
    %p60 = scmp.ne.s32.totalorder %s51, %s52
    %p61 = scmp.eq.s32.totalorder %s20, 0
    %p62 = por %p60, %p61
    %p63 = scmp.ne.s32.totalorder %s51, %s52
    %p64 = scmp.eq.s32.totalorder %s21, 1
    %p65 = por %p63, %p64
    %p67 = scmp.ne.s32.totalorder %s52, %s66
    %p68 = scmp.eq.s32.totalorder %s21, 0
    %p69 = por %p67, %p68
    %s71 = sadd.s32 %s70, 1
    %p74 = scmp.eq.s32.totalorder %s15, 1
    %p75 = scmp.ne.s32.totalorder %s70, %s72
    %p76 = scmp.eq.s32.totalorder %s15, 0
    %p77 = por %p75, %p76
    %p78 = scmp.ne.s32.totalorder %s70, %s72
    %p79 = scmp.eq.s32.totalorder %s20, 1
    %p80 = por %p78, %p79
    %p81 = scmp.ne.s32.totalorder %s72, %s73
    %p82 = scmp.eq.s32.totalorder %s20, 0
    %p83 = por %p81, %p82
    %p84 = scmp.ne.s32.totalorder %s72, %s73
    %p85 = scmp.eq.s32.totalorder %s21, 1
    %p86 = por %p84, %p85
    %p88 = scmp.ne.s32.totalorder %s73, %s87
    %p89 = scmp.eq.s32.totalorder %s21, 0
    %p90 = por %p88, %p89
    %s92 = sadd.s32 %s91, 1
    %p95 = scmp.eq.s32.totalorder %s15, 1
    %p96 = scmp.ne.s32.totalorder %s91, %s93
    %p97 = scmp.eq.s32.totalorder %s15, 0
    %p98 = por %p96, %p97
    %p99 = scmp.ne.s32.totalorder %s91, %s93
    %p100 = scmp.eq.s32.totalorder %s20, 1
    %p101 = por %p99, %p100
    %p102 = scmp.ne.s32.totalorder %s93, %s94
    %p103 = scmp.eq.s32.totalorder %s20, 0
    %p104 = por %p102, %p103
    %p105 = scmp.ne.s32.totalorder %s93, %s94
    %p106 = scmp.eq.s32.totalorder %s21, 1
    %p107 = por %p105, %p106
    %p109 = scmp.ne.s32.totalorder %s94, %s108
    %p110 = scmp.eq.s32.totalorder %s21, 0
    %p111 = por %p109, %p110
    %s113 = sadd.s32 %s112, 1
    %p116 = scmp.eq.s32.totalorder %s15, 1
    %p117 = scmp.ne.s32.totalorder %s112, %s114
    %p118 = scmp.eq.s32.totalorder %s15, 0
    %p119 = por %p117, %p118
    %p120 = scmp.ne.s32.totalorder %s112, %s114
    %p121 = scmp.eq.s32.totalorder %s20, 1
    %p122 = por %p120, %p121
    %p123 = scmp.ne.s32.totalorder %s114, %s115
    %p124 = scmp.eq.s32.totalorder %s20, 0
    %p125 = por %p123, %p124
    %p126 = scmp.ne.s32.totalorder %s114, %s115
    %p127 = scmp.eq.s32.totalorder %s21, 1
    %p128 = por %p126, %p127
    %p130 = scmp.ne.s32.totalorder %s115, %s129
    %p131 = scmp.eq.s32.totalorder %s21, 0
    %p132 = por %p130, %p131
    %s134 = sadd.s32 %s133, 1
    %p137 = scmp.eq.s32.totalorder %s15, 1
    %p138 = scmp.ne.s32.totalorder %s133, %s135
    %p139 = scmp.eq.s32.totalorder %s15, 0
    %p140 = por %p138, %p139
    %p141 = scmp.ne.s32.totalorder %s133, %s135
    %p142 = scmp.eq.s32.totalorder %s20, 1
    %p143 = por %p141, %p142
    %p144 = scmp.ne.s32.totalorder %s135, %s136
    %p145 = scmp.eq.s32.totalorder %s20, 0
    %p146 = por %p144, %p145
    %p147 = scmp.ne.s32.totalorder %s135, %s136
    %p148 = scmp.eq.s32.totalorder %s21, 1
    %p149 = por %p147, %p148
    %p151 = scmp.ne.s32.totalorder %s136, %s150
    %p152 = scmp.eq.s32.totalorder %s21, 0
    %p153 = por %p151, %p152
    %s155 = sadd.s32 %s154, 1
    %p158 = scmp.eq.s32.totalorder %s15, 1
    %p159 = scmp.ne.s32.totalorder %s154, %s156
    %p160 = scmp.eq.s32.totalorder %s15, 0
    %p161 = por %p159, %p160
    %p162 = scmp.ne.s32.totalorder %s154, %s156
    %p163 = scmp.eq.s32.totalorder %s20, 1
    %p164 = por %p162, %p163
    %p165 = scmp.ne.s32.totalorder %s156, %s157
    %p166 = scmp.eq.s32.totalorder %s20, 0
    %p167 = por %p165, %p166
    %p168 = scmp.ne.s32.totalorder %s156, %s157
    %p169 = scmp.eq.s32.totalorder %s21, 1
    %p170 = por %p168, %p169
    %p172 = scmp.ne.s32.totalorder %s157, %s171
    %p173 = scmp.eq.s32.totalorder %s21, 0
    %p174 = por %p172, %p173
    %s176 = sadd.s32 %s175, 1
    %p179 = scmp.eq.s32.totalorder %s15, 1
    %p180 = scmp.ne.s32.totalorder %s175, %s177
    %p181 = scmp.eq.s32.totalorder %s15, 0
    %p182 = por %p180, %p181
    %p183 = scmp.ne.s32.totalorder %s175, %s177
    %p184 = scmp.eq.s32.totalorder %s20, 1
    %p185 = por %p183, %p184
    %p186 = scmp.ne.s32.totalorder %s177, %s178
    %p187 = scmp.eq.s32.totalorder %s20, 0
    %p188 = por %p186, %p187
    %p189 = scmp.ne.s32.totalorder %s177, %s178
    %p190 = scmp.eq.s32.totalorder %s21, 1
    %p191 = por %p189, %p190
    %p193 = scmp.ne.s32.totalorder %s178, %s192
    %p194 = scmp.eq.s32.totalorder %s21, 0
    %p195 = por %p193, %p194
    %s197 = sadd.s32 %s196, 1
    %p200 = scmp.eq.s32.totalorder %s15, 1
    %p201 = scmp.ne.s32.totalorder %s196, %s198
    %p202 = scmp.eq.s32.totalorder %s15, 0
    %p203 = por %p201, %p202
    %p204 = scmp.ne.s32.totalorder %s196, %s198
    %p205 = scmp.eq.s32.totalorder %s20, 1
    %p206 = por %p204, %p205
    %p207 = scmp.ne.s32.totalorder %s198, %s199
    %p208 = scmp.eq.s32.totalorder %s20, 0
    %p209 = por %p207, %p208
    %p210 = scmp.ne.s32.totalorder %s198, %s199
    %p211 = scmp.eq.s32.totalorder %s21, 1
    %p212 = por %p210, %p211
    %p214 = scmp.ne.s32.totalorder %s199, %s213
    %p215 = scmp.eq.s32.totalorder %s21, 0
    %p216 = por %p214, %p215
    %s217 = ssub.s32 %s15, %s22
    %p218 = scmp.eq.s32.totalorder %s217, 0
    %s220 = sadd.s32 %s219, 1
    %s221 = scalar_select %p218, %s219, %s220
    %p224 = pneg %p218
    %p225 = scmp.eq.s32.totalorder %s15, 1
    %p226 = por %p224, %p225
    %p227 = scmp.ne.s32.totalorder %s219, %s222
    %p228 = scmp.eq.s32.totalorder %s15, 0
    %p229 = por %p227, %p228
    %p230 = scmp.ne.s32.totalorder %s219, %s222
    %p231 = scmp.eq.s32.totalorder %s20, 1
    %p232 = por %p230, %p231
    %p233 = scmp.ne.s32.totalorder %s222, %s223
    %p234 = scmp.eq.s32.totalorder %s20, 0
    %p235 = por %p233, %p234
    %p236 = scmp.ne.s32.totalorder %s222, %s223
    %p237 = scmp.eq.s32.totalorder %s21, 1
    %p238 = por %p236, %p237
    %p240 = scmp.ne.s32.totalorder %s223, %s239
    %p241 = scmp.eq.s32.totalorder %s21, 0
    %p242 = por %p240, %p241
    %p243 = scmp.le.s32.totalorder 1, %s15
    %p244 = scmp.lt.s32.totalorder %s15, 3
    %p245 = pnand %p243, %p244
    %p246 = pneg %p245
    // Predicated region
    $region9: #{disc_opt_block_pallas.1} parent=5 // pred_check
      _
    $region10: #{disc_opt_block_pallas.1} parent=5 // pred_check_branch
      %248 = sbr.rel (%p245) target = $region12
    $region11: #{disc_opt_block_pallas.1} parent=5 // pred_region
      %s249 = ssub.s32 %s15, 1
      // Predicated region
      $region13: #{disc_opt_block_pallas.1} parent=11 // pred_check
        %p250 = pneg %p62
      $region14: #{disc_opt_block_pallas.1} parent=11 // pred_check_branch
        %252 = sbr.rel (%p250) target = $region16
      $region15: #{disc_opt_block_pallas.1} parent=11 // pred_region
        _
      $region16: #{disc_opt_block_pallas.1} parent=11 // pred_fallthru
        _
      // Predicated region
      $region17: #{disc_opt_block_pallas.1} parent=11 // pred_check
        %p253 = pneg %p83
      $region18: #{disc_opt_block_pallas.1} parent=11 // pred_check_branch
        %255 = sbr.rel (%p253) target = $region20
      $region19: #{disc_opt_block_pallas.1} parent=11 // pred_region
        _
      $region20: #{disc_opt_block_pallas.1} parent=11 // pred_fallthru
        _
      // Predicated region
      $region21: #{disc_opt_block_pallas.1} parent=11 // pred_check
        %p256 = pneg %p104
      $region22: #{disc_opt_block_pallas.1} parent=11 // pred_check_branch
        %258 = sbr.rel (%p256) target = $region24
      $region23: #{disc_opt_block_pallas.1} parent=11 // pred_region
        _
      $region24: #{disc_opt_block_pallas.1} parent=11 // pred_fallthru
        _
      // Predicated region
      $region25: #{disc_opt_block_pallas.1} parent=11 // pred_check
        %p259 = pneg %p125
      $region26: #{disc_opt_block_pallas.1} parent=11 // pred_check_branch
        %261 = sbr.rel (%p259) target = $region28
      $region27: #{disc_opt_block_pallas.1} parent=11 // pred_region
        _
      $region28: #{disc_opt_block_pallas.1} parent=11 // pred_fallthru
        _
      // Predicated region
      $region29: #{disc_opt_block_pallas.1} parent=11 // pred_check
        %p262 = pneg %p146
      $region30: #{disc_opt_block_pallas.1} parent=11 // pred_check_branch
        %264 = sbr.rel (%p262) target = $region32
      $region31: #{disc_opt_block_pallas.1} parent=11 // pred_region
        _
      $region32: #{disc_opt_block_pallas.1} parent=11 // pred_fallthru
        _
      // Predicated region
      $region33: #{disc_opt_block_pallas.1} parent=11 // pred_check
        %p265 = pneg %p167
      $region34: #{disc_opt_block_pallas.1} parent=11 // pred_check_branch
        %267 = sbr.rel (%p265) target = $region36
      $region35: #{disc_opt_block_pallas.1} parent=11 // pred_region
        _
      $region36: #{disc_opt_block_pallas.1} parent=11 // pred_fallthru
        _
      // Predicated region
      $region37: #{disc_opt_block_pallas.1} parent=11 // pred_check
        %p268 = pneg %p188
      $region38: #{disc_opt_block_pallas.1} parent=11 // pred_check_branch
        %270 = sbr.rel (%p268) target = $region40
      $region39: #{disc_opt_block_pallas.1} parent=11 // pred_region
        _
      $region40: #{disc_opt_block_pallas.1} parent=11 // pred_fallthru
        _
      // Predicated region
      $region41: #{disc_opt_block_pallas.1} parent=11 // pred_check
        %p271 = pneg %p209
      $region42: #{disc_opt_block_pallas.1} parent=11 // pred_check_branch
        %273 = sbr.rel (%p271) target = $region44
      $region43: #{disc_opt_block_pallas.1} parent=11 // pred_region
        _
      $region44: #{disc_opt_block_pallas.1} parent=11 // pred_fallthru
        _
    $region12: #{disc_opt_block_pallas.1} parent=5 // pred_fallthru
      _
    %p274 = scmp.lt.s32.totalorder %s15, 2
    // Predicated region
    $region45: #{disc_opt_block_pallas.1} parent=5 // pred_check
      %p275 = pneg %p274
    $region46: #{disc_opt_block_pallas.1} parent=5 // pred_check_branch
      %277 = sbr.rel (%p275) target = $region48
    $region47: #{disc_opt_block_pallas.1} parent=5 // pred_region
      // Predicated region
      $region49: #{disc_opt_block_pallas.1} parent=47 // pred_check
        %p278 = pneg %p35
      $region50: #{disc_opt_block_pallas.1} parent=47 // pred_check_branch
        %280 = sbr.rel (%p278) target = $region52
      $region51: #{disc_opt_block_pallas.1} parent=47 // pred_region
        %p281 = scmp.lt.s32.totalorder %s15, 1
        %s282 = scalar_select %p281, %s15, 1
        %s283 = smul.addr %s282, 2
        %s284 = smul.addr %s283, 4
        %s285 = scalar_lea.vmem %s0, %s284
      $region52: #{disc_opt_block_pallas.1} parent=47 // pred_fallthru
        _
    $region48: #{disc_opt_block_pallas.1} parent=5 // pred_fallthru
      _
    %p286 = scmp.le.s32.totalorder 1, %s15
    %p287 = scmp.lt.s32.totalorder %s15, 3
    %p288 = pnand %p286, %p287
    %p289 = pneg %p288
    // Predicated region
    $region53: #{disc_opt_block_pallas.1} parent=5 // pred_check
      _
    $region54: #{disc_opt_block_pallas.1} parent=5 // pred_check_branch
      %291 = sbr.rel (%p288) target = $region56
    $region55: #{disc_opt_block_pallas.1} parent=5 // pred_region
      %s292 = ssub.s32 %s15, 1
      %p293 = scmp.lt.s32.totalorder %s20, 1
      %s294 = scalar_select %p293, %s20, 1
      %s295 = smul.addr %s294, 2
      %s296 = smul.addr %s295, 4
      %s297 = scalar_lea.vmem %s0, %s296
      %p298 = pneg %p41
      %p299 = pneg %p38
      %p300 = pneg %p62
      %p301 = pneg %p59
      %p302 = pneg %p83
      %p303 = pneg %p80
      %p304 = pneg %p104
      %p305 = pneg %p101
      %p306 = pneg %p125
      %p307 = pneg %p122
      %p308 = pneg %p146
      %p309 = pneg %p143
      %p310 = pneg %p167
      %p311 = pneg %p164
      %p312 = pneg %p188
      %p313 = pneg %p185
      %p314 = pneg %p209
      %p315 = pneg %p206
      %p316 = pneg %p235
      %p317 = pneg %p232
      %p318 = scmp.lt.s32.totalorder %s20, 1
      %s319 = scalar_select %p318, %s20, 1
      %s320 = smul.addr %s319, 8
      %s321 = scalar_lea.vmem %s9, %s320
      %p322 = scmp.lt.s32.totalorder %s20, 1
      %s323 = scalar_select %p322, %s20, 1
      %s324 = smul.addr %s323, 2
      %s325 = smul.addr %s324, 4
      %s326 = scalar_lea.vmem %s0, %s325
      %p327 = scmp.lt.s32.totalorder %s20, 1
      %s328 = scalar_select %p327, %s20, 1
      %s329 = smul.addr %s328, 8
      %s330 = scalar_lea.vmem %s9, %s329
      %v331 = vld [vmem:[%s326] sm:$0xff]
      %v332 = vld [vmem:[%s1] sm:$0xff]
      %v333 = vld [vmem:[%s2] sm:$0xff]
      %v335 = vcombine.high %v331, %v331
      %337 = vrot.lane.b32.xlu0 %v331, 17
      %v338 = vpop.permute.xlu0 %337
      %339 = vrot.lane.b32.xlu0 %v335, 17
      %v340 = vpop.permute.xlu0 %339
      %v341 = vlaneseq
      %v342 = vand.u32 %v341, 127
      %vm343 = vcmp.lt.s32.totalorder %v342, 17
      %v344 = vsel %vm343, %v338, %v340
      %v345 = vsel %vm343, %v340, %v338
      %v346 = vld [vmem:[%s7] ss:$8 sm:$0x3]
      %v348 = vlaneseq
      %v349 = vshrl.u32 %v348, 7
      %v350 = vsub.s32 0, %v349
      %v351 = vrot.slane %v346, %v350
      %v352 = vlaneseq
      %v353 = vshrl.u32 %v352, 7
      %v354 = vsub.s32 1, %v353
      %v355 = vrot.slane %v346, %v354
      %v358 = vmul.f32 %v345, %v351
      %v359 = vmul.f32 %v344, %v355
      %360 = vst [vmem:[#allocation2] sm:$0xf] %v358
      %361 = vst [vmem:[#allocation2 + $0x8] sm:$0xf] %v359
      %362 = vrot.lane.b32.xlu0 %v331, 16
      %v363 = vpop.permute.xlu0 %362
      %364 = vrot.lane.b32.xlu0 %v335, 16
      %v365 = vpop.permute.xlu0 %364
      %vm366 = vcmp.lt.s32.totalorder %v342, 16
      %v367 = vsel %vm366, %v363, %v365
      %v368 = vsel %vm366, %v365, %v363
      %s369 = scalar_lea.vmem %s7, 1
      %v370 = vld [vmem:[%s369] ss:$8 sm:$0x3]
      %v372 = vlaneseq
      %v373 = vshrl.u32 %v372, 7
      %v374 = vsub.s32 0, %v373
      %v375 = vrot.slane %v370, %v374
      %v376 = vlaneseq
      %v377 = vshrl.u32 %v376, 7
      %v378 = vsub.s32 1, %v377
      %v379 = vrot.slane %v370, %v378
      %v382 = vmul.f32 %v368, %v375
      %v383 = vmul.f32 %v367, %v379
      %v386 = vrot.slane %v382, 4
      %v387 = vrot.slane %v383, 4
      %390 = vst [vmem:[#allocation2] sm:$0xf0] %v386
      %391 = vst [vmem:[#allocation2 + $0x8] sm:$0xf0] %v387
      %392 = vrot.lane.b32.xlu0 %v331, 15
      %v393 = vpop.permute.xlu0 %392
      %394 = vrot.lane.b32.xlu0 %v335, 15
      %v395 = vpop.permute.xlu0 %394
      %vm396 = vcmp.lt.s32.totalorder %v342, 15
      %v397 = vsel %vm396, %v393, %v395
      %v398 = vsel %vm396, %v395, %v393
      %s399 = scalar_lea.vmem %s7, 2
      %v400 = vld [vmem:[%s399] ss:$8 sm:$0x3]
      %v402 = vlaneseq
      %v403 = vshrl.u32 %v402, 7
      %v404 = vsub.s32 0, %v403
      %v405 = vrot.slane %v400, %v404
      %v406 = vlaneseq
      %v407 = vshrl.u32 %v406, 7
      %v408 = vsub.s32 1, %v407
      %v409 = vrot.slane %v400, %v408
      %v412 = vmul.f32 %v398, %v405
      %v413 = vmul.f32 %v397, %v409
      %414 = vst [vmem:[#allocation2 + $0x10] sm:$0xf] %v412
      %415 = vst [vmem:[#allocation2 + $0x18] sm:$0xf] %v413
      %416 = vrot.lane.b32.xlu0 %v331, 1
      %v417 = vpop.permute.xlu0 %416
      %418 = vrot.lane.b32.xlu0 %v335, 1
      %v419 = vpop.permute.xlu0 %418
      %vm420 = vcmp.lt.s32.totalorder %v342, 1
      %v421 = vsel %vm420, %v417, %v419
      %v422 = vsel %vm420, %v419, %v417
      %s423 = scalar_lea.vmem %s7, 3
      %v424 = vld [vmem:[%s423] ss:$8 sm:$0x3]
      %v426 = vlaneseq
      %v427 = vshrl.u32 %v426, 7
      %v428 = vsub.s32 0, %v427
      %v429 = vrot.slane %v424, %v428
      %v430 = vlaneseq
      %v431 = vshrl.u32 %v430, 7
      %v432 = vsub.s32 1, %v431
      %v433 = vrot.slane %v424, %v432
      %v436 = vmul.f32 %v422, %v429
      %v437 = vmul.f32 %v421, %v433
      %v440 = vrot.slane %v436, 4
      %v441 = vrot.slane %v437, 4
      %444 = vst [vmem:[#allocation2 + $0x10] sm:$0xf0] %v440
      %445 = vst [vmem:[#allocation2 + $0x18] sm:$0xf0] %v441
      %446 = vst [vmem:[#allocation2 + $0x20] sm:$0xf] %v331
      %447 = vst [vmem:[#allocation2 + $0x28] sm:$0xf] %v335
      %448 = vrot.lane.b32.xlu0 %v331, 127
      %v449 = vpop.permute.xlu0 %448
      %450 = vrot.lane.b32.xlu0 %v335, 127
      %v451 = vpop.permute.xlu0 %450
      %vm452 = vcmp.lt.s32.totalorder %v342, 127
      %v453 = vsel %vm452, %v449, %v451
      %v454 = vsel %vm452, %v451, %v449
      %s455 = scalar_lea.vmem %s7, 5
      %v456 = vld [vmem:[%s455] ss:$8 sm:$0x3]
      %v458 = vlaneseq
      %v459 = vshrl.u32 %v458, 7
      %v460 = vsub.s32 0, %v459
      %v461 = vrot.slane %v456, %v460
      %v462 = vlaneseq
      %v463 = vshrl.u32 %v462, 7
      %v464 = vsub.s32 1, %v463
      %v465 = vrot.slane %v456, %v464
      %v468 = vmul.f32 %v453, %v461
      %v469 = vmul.f32 %v454, %v465
      %v472 = vrot.slane %v468, 4
      %v473 = vrot.slane %v469, 4
      %476 = vst [vmem:[#allocation2 + $0x20] sm:$0xf0] %v472
      %477 = vst [vmem:[#allocation2 + $0x28] sm:$0xf0] %v473
      %478 = vrot.lane.b32.xlu0 %v331, 113
      %v479 = vpop.permute.xlu0 %478
      %480 = vrot.lane.b32.xlu0 %v335, 113
      %v481 = vpop.permute.xlu0 %480
      %vm482 = vcmp.lt.s32.totalorder %v342, 113
      %v483 = vsel %vm482, %v479, %v481
      %v484 = vsel %vm482, %v481, %v479
      %s485 = scalar_lea.vmem %s7, 6
      %v486 = vld [vmem:[%s485] ss:$8 sm:$0x3]
      %v488 = vlaneseq
      %v489 = vshrl.u32 %v488, 7
      %v490 = vsub.s32 0, %v489
      %v491 = vrot.slane %v486, %v490
      %v492 = vlaneseq
      %v493 = vshrl.u32 %v492, 7
      %v494 = vsub.s32 1, %v493
      %v495 = vrot.slane %v486, %v494
      %v498 = vmul.f32 %v483, %v491
      %v499 = vmul.f32 %v484, %v495
      %500 = vst [vmem:[#allocation2 + $0x30] sm:$0xf] %v498
      %501 = vst [vmem:[#allocation2 + $0x38] sm:$0xf] %v499
      %502 = vrot.lane.b32.xlu0 %v331, 112
      %v503 = vpop.permute.xlu0 %502
      %504 = vrot.lane.b32.xlu0 %v335, 112
      %v505 = vpop.permute.xlu0 %504
      %vm506 = vcmp.lt.s32.totalorder %v342, 112
      %v507 = vsel %vm506, %v503, %v505
      %v508 = vsel %vm506, %v505, %v503
      %s509 = scalar_lea.vmem %s7, 7
      %v510 = vld [vmem:[%s509] ss:$8 sm:$0x3]
      %v512 = vlaneseq
      %v513 = vshrl.u32 %v512, 7
      %v514 = vsub.s32 0, %v513
      %v515 = vrot.slane %v510, %v514
      %v516 = vlaneseq
      %v517 = vshrl.u32 %v516, 7
      %v518 = vsub.s32 1, %v517
      %v519 = vrot.slane %v510, %v518
      %v522 = vmul.f32 %v507, %v515
      %v523 = vmul.f32 %v508, %v519
      %v526 = vrot.slane %v522, 4
      %v527 = vrot.slane %v523, 4
      %530 = vst [vmem:[#allocation2 + $0x30] sm:$0xf0] %v526
      %531 = vst [vmem:[#allocation2 + $0x38] sm:$0xf0] %v527
      %532 = vrot.lane.b32.xlu0 %v331, 111
      %v533 = vpop.permute.xlu0 %532
      %534 = vrot.lane.b32.xlu0 %v335, 111
      %v535 = vpop.permute.xlu0 %534
      %vm536 = vcmp.lt.s32.totalorder %v342, 111
      %v537 = vsel %vm536, %v533, %v535
      %v538 = vsel %vm536, %v535, %v533
      %s539 = scalar_lea.vmem %s7, 16
      %v540 = vld [vmem:[%s539] ss:$8 sm:$0x3]
      %v542 = vlaneseq
      %v543 = vshrl.u32 %v542, 7
      %v544 = vsub.s32 0, %v543
      %v545 = vrot.slane %v540, %v544
      %v546 = vlaneseq
      %v547 = vshrl.u32 %v546, 7
      %v548 = vsub.s32 1, %v547
      %v549 = vrot.slane %v540, %v548
      %v552 = vmul.f32 %v537, %v545
      %v553 = vmul.f32 %v538, %v549
      %554 = vst [vmem:[#allocation2 + $0x40] sm:$0xf] %v552
      %555 = vst [vmem:[#allocation2 + $0x48] sm:$0xf] %v553
      %v556 = vld [vmem:[#allocation2] sm:$0xff]
      %v557 = vld [vmem:[#allocation2 + $0x8] sm:$0xff]
      %v558 = vld [vmem:[#allocation2 + $0x10] sm:$0xff]
      %v559 = vld [vmem:[#allocation2 + $0x18] sm:$0xff]
      %v560 = vld [vmem:[#allocation2 + $0x20] sm:$0xff]
      %v561 = vld [vmem:[#allocation2 + $0x28] sm:$0xff]
      %v562 = vld [vmem:[#allocation2 + $0x30] sm:$0xff]
      %v563 = vld [vmem:[#allocation2 + $0x38] sm:$0xff]
      %v564 = vld [vmem:[#allocation2 + $0x40] sm:$0xf]
      %v565 = vld [vmem:[#allocation2 + $0x48] sm:$0xf]
      %567 = vset.pattern.permute.xlu0 0
      %568 = vperm.xlu0 %567, %v333
      %v569 = vpop.permute.xlu0 %568
      %vm571 = vcmask 293888
      %v573 = vsel %vm571, %v332, 0
      %vm575 = vcmask 1043456
      %v577 = vsel %vm575, %v564, 0
      %v580 = vsel %vm575, %v565, 0
      %582 = vmatprep.subr.mxu0 %v557
      %583 = vmatpush1.msra.mxu0 %v556
      %584 = vmatprep.subr.mxu0 %v559
      %585 = vmatpush1.msra.mxu0 %v558
      %586 = vmatprep.subr.mxu0 %v561
      %587 = vmatpush1.msra.mxu0 %v560
      %588 = vmatprep.subr.mxu0 %v563
      %589 = vmatpush1.msra.mxu0 %v562
      %590 = vmatprep.subr.mxu0 %v580
      %591 = vmatpush1.msra.mxu0 %v577
      %592 = vmatprep.subr.mxu0 0.0
      %593 = vmatpush1.msra.mxu0 0.0
      %594 = vmatprep.subr.mxu0 0.0
      %595 = vmatpush1.msra.mxu0 0.0
      %596 = vmatprep.subr.mxu0 0.0
      %597 = vmatpush1.msra.mxu0 0.0
      %598 = vmatprep.subr.mxu0 0.0
      %599 = vmatpush1.msra.mxu0 0.0
      %600 = vmatprep.subr.mxu0 0.0
      %601 = vmatpush1.msra.mxu0 0.0
      %602 = vmatprep.subr.mxu0 0.0
      %603 = vmatpush1.msra.mxu0 0.0
      %604 = vmatprep.subr.mxu0 0.0
      %605 = vmatpush1.msra.mxu0 0.0
      %606 = vmatprep.subr.mxu0 0.0
      %607 = vmatpush1.msra.mxu0 0.0
      %608 = vmatprep.subr.mxu0 0.0
      %609 = vmatpush1.msra.mxu0 0.0
      %610 = vmatprep.subr.mxu0 0.0
      %611 = vmatpush1.msra.mxu0 0.0
      %612 = vmatprep.subr.mxu0 0.0
      %613 = vmatpush1.msra.mxu0 0.0
      %614 = vmatprep.subr.mxu0 0.0
      %615 = vmatpush1.msra.mxu0 0.0
      %616 = vmatprep.subr.mxu0 0.0
      %617 = vmatpush1.msra.mxu0 0.0
      %618 = vmatprep.subr.mxu0 0.0
      %619 = vmatpush1.msra.mxu0 0.0
      %620 = vmatprep.subr.mxu0 0.0
      %621 = vmatpush1.msra.mxu0 0.0
      %622 = vmatprep.subr.mxu0 0.0
      %623 = vmatpush1.msra.mxu0 0.0
      %624 = vmatprep.subr.mxu0 0.0
      %625 = vmatpush1.msra.mxu0 0.0
      %626 = vmatprep.subr.mxu0 0.0
      %627 = vmatpush1.msra.mxu0 0.0
      %628 = vmatprep.subr.mxu0 0.0
      %629 = vmatpush1.msra.mxu0 0.0
      %630 = vmatprep.subr.mxu0 0.0
      %631 = vmatpush1.msra.mxu0 0.0
      %632 = vmatprep.subr.mxu0 0.0
      %633 = vmatpush1.msra.mxu0 0.0
      %634 = vmatprep.subr.mxu0 0.0
      %635 = vmatpush1.msra.mxu0 0.0
      %636 = vmatprep.subr.mxu0 0.0
      %637 = vmatpush1.msra.mxu0 0.0
      %638 = vmatprep.subr.mxu0 0.0
      %639 = vmatpush1.msra.mxu0 0.0
      %640 = vmatprep.subr.mxu0 0.0
      %641 = vmatpush1.msra.mxu0 0.0
      %642 = vmatprep.subr.mxu0 0.0
      %643 = vmatpush1.msra.mxu0 0.0
      %644 = vmatprep.subr.mxu0 0.0
      %645 = vmatpush1.msra.mxu0 0.0
      %646 = vmatprep.mubr.f32.mxu0 0.0
      %647 = vmatmul.mubr.f32.gmra.mrb[0].mxu0 %v573
      %v648 = vpop.f32.mrb[0].mxu0
      %v649 = vadd.f32 %v569, %v648
      %v650 = vpop.f32.mrb[0].mxu0
      %v651 = vadd.f32 %v569, %v650
      %652 = vdwg.mxu0
      %v653 = vmax.f32 %v649, 0.0
      %v654 = vmax.f32 %v651, 0.0
      %v655 = vld [vmem:[%s3] sm:$0xff]
      %v656 = vld [vmem:[%s4] sm:$0xff]
      %657 = vrot.lane.b32.xlu0 %v653, 17
      %v658 = vpop.permute.xlu0 %657
      %659 = vrot.lane.b32.xlu0 %v654, 17
      %v660 = vpop.permute.xlu0 %659
      %v661 = vsel %vm343, %v658, %v660
      %v662 = vsel %vm343, %v660, %v658
      %v663 = vld [vmem:[%s7] ss:$8 sm:$0x3]
      %v665 = vlaneseq
      %v666 = vshrl.u32 %v665, 7
      %v667 = vsub.s32 0, %v666
      %v668 = vrot.slane %v663, %v667
      %v669 = vlaneseq
      %v670 = vshrl.u32 %v669, 7
      %v671 = vsub.s32 1, %v670
      %v672 = vrot.slane %v663, %v671
      %v675 = vmul.f32 %v662, %v668
      %v676 = vmul.f32 %v661, %v672
      %677 = vst [vmem:[#allocation3] sm:$0xff] %v675
      %678 = vst [vmem:[#allocation3 + $0x8] sm:$0xff] %v676
      %679 = vrot.lane.b32.xlu0 %v653, 16
      %v680 = vpop.permute.xlu0 %679
      %681 = vrot.lane.b32.xlu0 %v654, 16
      %v682 = vpop.permute.xlu0 %681
      %v683 = vsel %vm366, %v680, %v682
      %v684 = vsel %vm366, %v682, %v680
      %v685 = vld [vmem:[%s369] ss:$8 sm:$0x3]
      %v687 = vlaneseq
      %v688 = vshrl.u32 %v687, 7
      %v689 = vsub.s32 0, %v688
      %v690 = vrot.slane %v685, %v689
      %v691 = vlaneseq
      %v692 = vshrl.u32 %v691, 7
      %v693 = vsub.s32 1, %v692
      %v694 = vrot.slane %v685, %v693
      %v697 = vmul.f32 %v684, %v690
      %v698 = vmul.f32 %v683, %v694
      %699 = vst [vmem:[#allocation3 + $0x10] sm:$0xff] %v697
      %700 = vst [vmem:[#allocation3 + $0x18] sm:$0xff] %v698
      %701 = vrot.lane.b32.xlu0 %v653, 15
      %v702 = vpop.permute.xlu0 %701
      %703 = vrot.lane.b32.xlu0 %v654, 15
      %v704 = vpop.permute.xlu0 %703
      %v705 = vsel %vm396, %v702, %v704
      %v706 = vsel %vm396, %v704, %v702
      %v707 = vld [vmem:[%s399] ss:$8 sm:$0x3]
      %v709 = vlaneseq
      %v710 = vshrl.u32 %v709, 7
      %v711 = vsub.s32 0, %v710
      %v712 = vrot.slane %v707, %v711
      %v713 = vlaneseq
      %v714 = vshrl.u32 %v713, 7
      %v715 = vsub.s32 1, %v714
      %v716 = vrot.slane %v707, %v715
      %v719 = vmul.f32 %v706, %v712
      %v720 = vmul.f32 %v705, %v716
      %721 = vst [vmem:[#allocation3 + $0x20] sm:$0xff] %v719
      %722 = vst [vmem:[#allocation3 + $0x28] sm:$0xff] %v720
      %723 = vrot.lane.b32.xlu0 %v653, 1
      %v724 = vpop.permute.xlu0 %723
      %725 = vrot.lane.b32.xlu0 %v654, 1
      %v726 = vpop.permute.xlu0 %725
      %v727 = vsel %vm420, %v724, %v726
      %v728 = vsel %vm420, %v726, %v724
      %v729 = vld [vmem:[%s423] ss:$8 sm:$0x3]
      %v731 = vlaneseq
      %v732 = vshrl.u32 %v731, 7
      %v733 = vsub.s32 0, %v732
      %v734 = vrot.slane %v729, %v733
      %v735 = vlaneseq
      %v736 = vshrl.u32 %v735, 7
      %v737 = vsub.s32 1, %v736
      %v738 = vrot.slane %v729, %v737
      %v741 = vmul.f32 %v728, %v734
      %v742 = vmul.f32 %v727, %v738
      %743 = vst [vmem:[#allocation3 + $0x30] sm:$0xff] %v741
      %744 = vst [vmem:[#allocation3 + $0x38] sm:$0xff] %v742
      %745 = vst [vmem:[#allocation3 + $0x40] sm:$0xff] %v653
      %746 = vst [vmem:[#allocation3 + $0x48] sm:$0xff] %v654
      %747 = vrot.lane.b32.xlu0 %v653, 127
      %v748 = vpop.permute.xlu0 %747
      %749 = vrot.lane.b32.xlu0 %v654, 127
      %v750 = vpop.permute.xlu0 %749
      %v751 = vsel %vm452, %v748, %v750
      %v752 = vsel %vm452, %v750, %v748
      %v753 = vld [vmem:[%s455] ss:$8 sm:$0x3]
      %v755 = vlaneseq
      %v756 = vshrl.u32 %v755, 7
      %v757 = vsub.s32 0, %v756
      %v758 = vrot.slane %v753, %v757
      %v759 = vlaneseq
      %v760 = vshrl.u32 %v759, 7
      %v761 = vsub.s32 1, %v760
      %v762 = vrot.slane %v753, %v761
      %v765 = vmul.f32 %v751, %v758
      %v766 = vmul.f32 %v752, %v762
      %767 = vst [vmem:[#allocation3 + $0x50] sm:$0xff] %v765
      %768 = vst [vmem:[#allocation3 + $0x58] sm:$0xff] %v766
      %769 = vrot.lane.b32.xlu0 %v653, 113
      %v770 = vpop.permute.xlu0 %769
      %771 = vrot.lane.b32.xlu0 %v654, 113
      %v772 = vpop.permute.xlu0 %771
      %v773 = vsel %vm482, %v770, %v772
      %v774 = vsel %vm482, %v772, %v770
      %v775 = vld [vmem:[%s485] ss:$8 sm:$0x3]
      %v777 = vlaneseq
      %v778 = vshrl.u32 %v777, 7
      %v779 = vsub.s32 0, %v778
      %v780 = vrot.slane %v775, %v779
      %v781 = vlaneseq
      %v782 = vshrl.u32 %v781, 7
      %v783 = vsub.s32 1, %v782
      %v784 = vrot.slane %v775, %v783
      %v787 = vmul.f32 %v773, %v780
      %v788 = vmul.f32 %v774, %v784
      %789 = vst [vmem:[#allocation3 + $0x60] sm:$0xff] %v787
      %790 = vst [vmem:[#allocation3 + $0x68] sm:$0xff] %v788
      %791 = vrot.lane.b32.xlu0 %v653, 112
      %v792 = vpop.permute.xlu0 %791
      %793 = vrot.lane.b32.xlu0 %v654, 112
      %v794 = vpop.permute.xlu0 %793
      %v795 = vsel %vm506, %v792, %v794
      %v796 = vsel %vm506, %v794, %v792
      %v797 = vld [vmem:[%s509] ss:$8 sm:$0x3]
      %v799 = vlaneseq
      %v800 = vshrl.u32 %v799, 7
      %v801 = vsub.s32 0, %v800
      %v802 = vrot.slane %v797, %v801
      %v803 = vlaneseq
      %v804 = vshrl.u32 %v803, 7
      %v805 = vsub.s32 1, %v804
      %v806 = vrot.slane %v797, %v805
      %v809 = vmul.f32 %v795, %v802
      %v810 = vmul.f32 %v796, %v806
      %811 = vst [vmem:[#allocation3 + $0x70] sm:$0xff] %v809
      %812 = vst [vmem:[#allocation3 + $0x78] sm:$0xff] %v810
      %813 = vrot.lane.b32.xlu0 %v653, 111
      %v814 = vpop.permute.xlu0 %813
      %815 = vrot.lane.b32.xlu0 %v654, 111
      %v816 = vpop.permute.xlu0 %815
      %v817 = vsel %vm536, %v814, %v816
      %v818 = vsel %vm536, %v816, %v814
      %v819 = vld [vmem:[%s539] ss:$8 sm:$0x3]
      %v821 = vlaneseq
      %v822 = vshrl.u32 %v821, 7
      %v823 = vsub.s32 0, %v822
      %v824 = vrot.slane %v819, %v823
      %v825 = vlaneseq
      %v826 = vshrl.u32 %v825, 7
      %v827 = vsub.s32 1, %v826
      %v828 = vrot.slane %v819, %v827
      %v831 = vmul.f32 %v817, %v824
      %v832 = vmul.f32 %v818, %v828
      %833 = vst [vmem:[#allocation3 + $0x80] sm:$0xff] %v831
      %834 = vst [vmem:[#allocation3 + $0x88] sm:$0xff] %v832
      %v835 = vld [vmem:[#allocation3] sm:$0xff]
      %v836 = vld [vmem:[#allocation3 + $0x8] sm:$0xff]
      %v837 = vld [vmem:[#allocation3 + $0x10] sm:$0xff]
      %v838 = vld [vmem:[#allocation3 + $0x18] sm:$0xff]
      %v839 = vld [vmem:[#allocation3 + $0x20] sm:$0xff]
      %v840 = vld [vmem:[#allocation3 + $0x28] sm:$0xff]
      %v841 = vld [vmem:[#allocation3 + $0x30] sm:$0xff]
      %v842 = vld [vmem:[#allocation3 + $0x38] sm:$0xff]
      %v843 = vld [vmem:[#allocation3 + $0x40] sm:$0xff]
      %v844 = vld [vmem:[#allocation3 + $0x48] sm:$0xff]
      %v845 = vld [vmem:[#allocation3 + $0x50] sm:$0xff]
      %v846 = vld [vmem:[#allocation3 + $0x58] sm:$0xff]
      %v847 = vld [vmem:[#allocation3 + $0x60] sm:$0xff]
      %v848 = vld [vmem:[#allocation3 + $0x68] sm:$0xff]
      %v849 = vld [vmem:[#allocation3 + $0x70] sm:$0xff]
      %v850 = vld [vmem:[#allocation3 + $0x78] sm:$0xff]
      %v851 = vld [vmem:[#allocation3 + $0x80] sm:$0xff]
      %v852 = vld [vmem:[#allocation3 + $0x88] sm:$0xff]
      %854 = vset.pattern.permute.xlu0 0
      %855 = vperm.xlu0 %854, %v656
      %v856 = vpop.permute.xlu0 %855
      %vm858 = vcmask 588800
      %v860 = vsel %vm858, %v655, 0
      %862 = vmatprep.subr.mxu0 %v836
      %863 = vmatpush1.msra.mxu0 %v835
      %864 = vmatprep.subr.mxu0 %v838
      %865 = vmatpush1.msra.mxu0 %v837
      %866 = vmatprep.subr.mxu0 %v840
      %867 = vmatpush1.msra.mxu0 %v839
      %868 = vmatprep.subr.mxu0 %v842
      %869 = vmatpush1.msra.mxu0 %v841
      %870 = vmatprep.subr.mxu0 %v844
      %871 = vmatpush1.msra.mxu0 %v843
      %872 = vmatprep.subr.mxu0 %v846
      %873 = vmatpush1.msra.mxu0 %v845
      %874 = vmatprep.subr.mxu0 %v848
      %875 = vmatpush1.msra.mxu0 %v847
      %876 = vmatprep.subr.mxu0 %v850
      %877 = vmatpush1.msra.mxu0 %v849
      %878 = vmatprep.subr.mxu0 %v852
      %879 = vmatpush1.msra.mxu0 %v851
      %880 = vmatprep.subr.mxu0 0.0
      %881 = vmatpush1.msra.mxu0 0.0
      %882 = vmatprep.subr.mxu0 0.0
      %883 = vmatpush1.msra.mxu0 0.0
      %884 = vmatprep.subr.mxu0 0.0
      %885 = vmatpush1.msra.mxu0 0.0
      %886 = vmatprep.subr.mxu0 0.0
      %887 = vmatpush1.msra.mxu0 0.0
      %888 = vmatprep.subr.mxu0 0.0
      %889 = vmatpush1.msra.mxu0 0.0
      %890 = vmatprep.subr.mxu0 0.0
      %891 = vmatpush1.msra.mxu0 0.0
      %892 = vmatprep.subr.mxu0 0.0
      %893 = vmatpush1.msra.mxu0 0.0
      %894 = vmatprep.subr.mxu0 0.0
      %895 = vmatpush1.msra.mxu0 0.0
      %896 = vmatprep.subr.mxu0 0.0
      %897 = vmatpush1.msra.mxu0 0.0
      %898 = vmatprep.subr.mxu0 0.0
      %899 = vmatpush1.msra.mxu0 0.0
      %900 = vmatprep.subr.mxu0 0.0
      %901 = vmatpush1.msra.mxu0 0.0
      %902 = vmatprep.subr.mxu0 0.0
      %903 = vmatpush1.msra.mxu0 0.0
      %904 = vmatprep.subr.mxu0 0.0
      %905 = vmatpush1.msra.mxu0 0.0
      %906 = vmatprep.subr.mxu0 0.0
      %907 = vmatpush1.msra.mxu0 0.0
      %908 = vmatprep.subr.mxu0 0.0
      %909 = vmatpush1.msra.mxu0 0.0
      %910 = vmatprep.subr.mxu0 0.0
      %911 = vmatpush1.msra.mxu0 0.0
      %912 = vmatprep.subr.mxu0 0.0
      %913 = vmatpush1.msra.mxu0 0.0
      %914 = vmatprep.subr.mxu0 0.0
      %915 = vmatpush1.msra.mxu0 0.0
      %916 = vmatprep.subr.mxu0 0.0
      %917 = vmatpush1.msra.mxu0 0.0
      %918 = vmatprep.subr.mxu0 0.0
      %919 = vmatpush1.msra.mxu0 0.0
      %920 = vmatprep.subr.mxu0 0.0
      %921 = vmatpush1.msra.mxu0 0.0
      %922 = vmatprep.subr.mxu0 0.0
      %923 = vmatpush1.msra.mxu0 0.0
      %924 = vmatprep.subr.mxu0 0.0
      %925 = vmatpush1.msra.mxu0 0.0
      %926 = vmatprep.mubr.f32.mxu0 0.0
      %927 = vmatmul.mubr.f32.gmra.mrb[0].mxu0 %v860
      %v928 = vpop.f32.mrb[0].mxu0
      %v929 = vadd.f32 %v856, %v928
      %v930 = vpop.f32.mrb[0].mxu0
      %v931 = vadd.f32 %v856, %v930
      %932 = vdwg.mxu0
      %v933 = vld [vmem:[%s8] sm:$0xff]
      %v934 = vld [vmem:[%s8 + $0x8] sm:$0xff]
      %v935 = vld [vmem:[%s8 + $0x10] sm:$0xff]
      %v936 = vld [vmem:[%s8 + $0x18] sm:$0xff]
      %v937 = vld [vmem:[%s8 + $0x20] sm:$0xff]
      %v938 = vld [vmem:[%s8 + $0x28] sm:$0xff]
      %v939 = vld [vmem:[%s8 + $0x30] sm:$0xff]
      %v940 = vld [vmem:[%s8 + $0x38] sm:$0xff]
      %v941 = vld [vmem:[%s8 + $0x40] sm:$0xff]
      %v942 = vld [vmem:[%s8 + $0x48] sm:$0xff]
      %v943 = vld [vmem:[%s8 + $0x50] sm:$0xff]
      %v944 = vld [vmem:[%s8 + $0x58] sm:$0xff]
      %v945 = vld [vmem:[%s8 + $0x60] sm:$0xff]
      %v946 = vld [vmem:[%s8 + $0x68] sm:$0xff]
      %v947 = vld [vmem:[%s8 + $0x70] sm:$0xff]
      %v948 = vld [vmem:[%s8 + $0x78] sm:$0xff]
      %v949 = vld [vmem:[%s8 + $0x80] sm:$0xff]
      %v950 = vld [vmem:[%s8 + $0x88] sm:$0xff]
      %v951 = vld [vmem:[%s8 + $0x90] sm:$0xff]
      %v952 = vld [vmem:[%s8 + $0x98] sm:$0xff]
      %v953 = vld [vmem:[%s8 + $0xa0] sm:$0xff]
      %v954 = vld [vmem:[%s8 + $0xa8] sm:$0xff]
      %v955 = vld [vmem:[%s8 + $0xb0] sm:$0xff]
      %v956 = vld [vmem:[%s8 + $0xb8] sm:$0xff]
      %v957 = vld [vmem:[%s8 + $0xc0] sm:$0xff]
      %v958 = vld [vmem:[%s8 + $0xc8] sm:$0xff]
      %v959 = vld [vmem:[%s8 + $0xd0] sm:$0xff]
      %v960 = vld [vmem:[%s8 + $0xd8] sm:$0xff]
      %v961 = vld [vmem:[%s8 + $0xe0] sm:$0xff]
      %v962 = vld [vmem:[%s8 + $0xe8] sm:$0xff]
      %v963 = vld [vmem:[%s8 + $0xf0] sm:$0xff]
      %v964 = vld [vmem:[%s8 + $0xf8] sm:$0xff]
      %965 = vmatprep.subr.mxu0 0.0
      %966 = vmatpush1.msra.mxu0 %v933
      %967 = vmatprep.subr.mxu0 0.0
      %968 = vmatpush1.msra.mxu0 %v934
      %969 = vmatprep.subr.mxu0 0.0
      %970 = vmatpush1.msra.mxu0 %v935
      %971 = vmatprep.subr.mxu0 0.0
      %972 = vmatpush1.msra.mxu0 %v936
      %973 = vmatprep.subr.mxu0 0.0
      %974 = vmatpush1.msra.mxu0 %v937
      %975 = vmatprep.subr.mxu0 0.0
      %976 = vmatpush1.msra.mxu0 %v938
      %977 = vmatprep.subr.mxu0 0.0
      %978 = vmatpush1.msra.mxu0 %v939
      %979 = vmatprep.subr.mxu0 0.0
      %980 = vmatpush1.msra.mxu0 %v940
      %981 = vmatprep.subr.mxu0 0.0
      %982 = vmatpush1.msra.mxu0 %v941
      %983 = vmatprep.subr.mxu0 0.0
      %984 = vmatpush1.msra.mxu0 %v942
      %985 = vmatprep.subr.mxu0 0.0
      %986 = vmatpush1.msra.mxu0 %v943
      %987 = vmatprep.subr.mxu0 0.0
      %988 = vmatpush1.msra.mxu0 %v944
      %989 = vmatprep.subr.mxu0 0.0
      %990 = vmatpush1.msra.mxu0 %v945
      %991 = vmatprep.subr.mxu0 0.0
      %992 = vmatpush1.msra.mxu0 %v946
      %993 = vmatprep.subr.mxu0 0.0
      %994 = vmatpush1.msra.mxu0 %v947
      %995 = vmatprep.subr.mxu0 0.0
      %996 = vmatpush1.msra.mxu0 %v948
      %997 = vmatprep.subr.mxu0 0.0
      %998 = vmatpush1.msra.mxu0 %v949
      %999 = vmatprep.subr.mxu0 0.0
      %1000 = vmatpush1.msra.mxu0 %v950
      %1001 = vmatprep.subr.mxu0 0.0
      %1002 = vmatpush1.msra.mxu0 %v951
      %1003 = vmatprep.subr.mxu0 0.0
      %1004 = vmatpush1.msra.mxu0 %v952
      %1005 = vmatprep.subr.mxu0 0.0
      %1006 = vmatpush1.msra.mxu0 %v953
      %1007 = vmatprep.subr.mxu0 0.0
      %1008 = vmatpush1.msra.mxu0 %v954
      %1009 = vmatprep.subr.mxu0 0.0
      %1010 = vmatpush1.msra.mxu0 %v955
      %1011 = vmatprep.subr.mxu0 0.0
      %1012 = vmatpush1.msra.mxu0 %v956
      %1013 = vmatprep.subr.mxu0 0.0
      %1014 = vmatpush1.msra.mxu0 %v957
      %1015 = vmatprep.subr.mxu0 0.0
      %1016 = vmatpush1.msra.mxu0 %v958
      %1017 = vmatprep.subr.mxu0 0.0
      %1018 = vmatpush1.msra.mxu0 %v959
      %1019 = vmatprep.subr.mxu0 0.0
      %1020 = vmatpush1.msra.mxu0 %v960
      %1021 = vmatprep.subr.mxu0 0.0
      %1022 = vmatpush1.msra.mxu0 %v961
      %1023 = vmatprep.subr.mxu0 0.0
      %1024 = vmatpush1.msra.mxu0 %v962
      %1025 = vmatprep.subr.mxu0 0.0
      %1026 = vmatpush1.msra.mxu0 %v963
      %1027 = vmatprep.subr.mxu0 0.0
      %1028 = vmatpush1.msra.mxu0 %v964
      %1029 = vmatprep.mubr.f32.mxu0 %v931
      %1030 = vmatmul.mubr.f32.gmra.mrb[0].mxu0 %v929
      %v1031 = vpop.f32.mrb[0].mxu0
      %v1032 = vadd.f32 0.0, %v1031
      %v1033 = vpop.f32.mrb[0].mxu0
      %1034 = vmatprep.mubr.f32.mxu0 %v335
      %1035 = vmatmul.mubr.f32.gmra.mrb[0].mxu0 %v331
      %v1036 = vpop.f32.mrb[0].mxu0
      %v1037 = vadd.f32 0.0, %v1036
      %v1038 = vpop.f32.mrb[0].mxu0
      %1039 = vdwg.mxu0
      %v1040 = vld [vmem:[%s5] sm:$0xff]
      %v1041 = vld [vmem:[%s6] sm:$0xff]
      %1043 = vset.pattern.permute.xlu0 0
      %1044 = vperm.xlu0 %1043, %v1041
      %v1045 = vpop.permute.xlu0 %1044
      %vm1047 = vcmask 97280
      %v1049 = vsel %vm1047, %v1040, 0
      %v1052 = vsel %vm575, %v1037, 0
      %1054 = vmatprep.subr.mxu0 0.0
      %1055 = vmatpush1.msra.mxu0 %v1032
      %1056 = vmatprep.subr.mxu0 0.0
      %1057 = vmatpush1.msra.mxu0 %v1052
      %1058 = vmatprep.subr.mxu0 0.0
      %1059 = vmatpush1.msra.mxu0 0.0
      %1060 = vmatprep.subr.mxu0 0.0
      %1061 = vmatpush1.msra.mxu0 0.0
      %1062 = vmatprep.subr.mxu0 0.0
      %1063 = vmatpush1.msra.mxu0 0.0
      %1064 = vmatprep.subr.mxu0 0.0
      %1065 = vmatpush1.msra.mxu0 0.0
      %1066 = vmatprep.subr.mxu0 0.0
      %1067 = vmatpush1.msra.mxu0 0.0
      %1068 = vmatprep.subr.mxu0 0.0
      %1069 = vmatpush1.msra.mxu0 0.0
      %1070 = vmatprep.subr.mxu0 0.0
      %1071 = vmatpush1.msra.mxu0 0.0
      %1072 = vmatprep.subr.mxu0 0.0
      %1073 = vmatpush1.msra.mxu0 0.0
      %1074 = vmatprep.subr.mxu0 0.0
      %1075 = vmatpush1.msra.mxu0 0.0
      %1076 = vmatprep.subr.mxu0 0.0
      %1077 = vmatpush1.msra.mxu0 0.0
      %1078 = vmatprep.subr.mxu0 0.0
      %1079 = vmatpush1.msra.mxu0 0.0
      %1080 = vmatprep.subr.mxu0 0.0
      %1081 = vmatpush1.msra.mxu0 0.0
      %1082 = vmatprep.subr.mxu0 0.0
      %1083 = vmatpush1.msra.mxu0 0.0
      %1084 = vmatprep.subr.mxu0 0.0
      %1085 = vmatpush1.msra.mxu0 0.0
      %1086 = vmatprep.subr.mxu0 0.0
      %1087 = vmatpush1.msra.mxu0 0.0
      %1088 = vmatprep.subr.mxu0 0.0
      %1089 = vmatpush1.msra.mxu0 0.0
      %1090 = vmatprep.subr.mxu0 0.0
      %1091 = vmatpush1.msra.mxu0 0.0
      %1092 = vmatprep.subr.mxu0 0.0
      %1093 = vmatpush1.msra.mxu0 0.0
      %1094 = vmatprep.subr.mxu0 0.0
      %1095 = vmatpush1.msra.mxu0 0.0
      %1096 = vmatprep.subr.mxu0 0.0
      %1097 = vmatpush1.msra.mxu0 0.0
      %1098 = vmatprep.subr.mxu0 0.0
      %1099 = vmatpush1.msra.mxu0 0.0
      %1100 = vmatprep.subr.mxu0 0.0
      %1101 = vmatpush1.msra.mxu0 0.0
      %1102 = vmatprep.subr.mxu0 0.0
      %1103 = vmatpush1.msra.mxu0 0.0
      %1104 = vmatprep.subr.mxu0 0.0
      %1105 = vmatpush1.msra.mxu0 0.0
      %1106 = vmatprep.subr.mxu0 0.0
      %1107 = vmatpush1.msra.mxu0 0.0
      %1108 = vmatprep.subr.mxu0 0.0
      %1109 = vmatpush1.msra.mxu0 0.0
      %1110 = vmatprep.subr.mxu0 0.0
      %1111 = vmatpush1.msra.mxu0 0.0
      %1112 = vmatprep.subr.mxu0 0.0
      %1113 = vmatpush1.msra.mxu0 0.0
      %1114 = vmatprep.subr.mxu0 0.0
      %1115 = vmatpush1.msra.mxu0 0.0
      %1116 = vmatprep.subr.mxu0 0.0
      %1117 = vmatpush1.msra.mxu0 0.0
      %1118 = vmatprep.mubr.f32.mxu0 0.0
      %1119 = vmatmul.mubr.f32.gmra.mrb[0].mxu0 %v1049
      %v1120 = vpop.f32.mrb[0].mxu0
      %v1121 = vadd.f32 %v1045, %v1120
      %v1122 = vpop.f32.mrb[0].mxu0
      %1123 = vdwg.mxu0
      %vm1124 = vcmask 523264
      %1125 = vst.msk [vmem:[%s330] sm:$0xff] %vm1124, %v1121
      %p1126 = scmp.lt.s32.totalorder %s20, 1
      %s1127 = scalar_select %p1126, %s20, 1
      %s1128 = smul.addr %s1127, 8
      %s1129 = scalar_lea.vmem %s9, %s1128
      // Predicated region
      $region57: #{disc_opt_block_pallas.1} parent=55 // pred_check
        %p1130 = pneg %p232
      $region58: #{disc_opt_block_pallas.1} parent=55 // pred_check_branch
        %1132 = sbr.rel (%p1130) target = $region60
      $region59: #{disc_opt_block_pallas.1} parent=55 // pred_region
        _
      $region60: #{disc_opt_block_pallas.1} parent=55 // pred_fallthru
        _
    $region56: #{disc_opt_block_pallas.1} parent=5 // pred_fallthru
      _
    %p1133 = scmp.le.s32.totalorder 2, %s15
    // Predicated region
    $region61: #{disc_opt_block_pallas.1} parent=5 // pred_check
      %p1134 = pneg %p1133
    $region62: #{disc_opt_block_pallas.1} parent=5 // pred_check_branch
      %1136 = sbr.rel (%p1134) target = $region64
    $region63: #{disc_opt_block_pallas.1} parent=5 // pred_region
      %s1137 = ssub.s32 %s15, 2
      // Predicated region
      $region65: #{disc_opt_block_pallas.1} parent=63 // pred_check
        %p1138 = pneg %p238
      $region66: #{disc_opt_block_pallas.1} parent=63 // pred_check_branch
        %1140 = sbr.rel (%p1138) target = $region68
      $region67: #{disc_opt_block_pallas.1} parent=63 // pred_region
        %p1141 = scmp.lt.s32.totalorder %s21, 1
        %s1142 = scalar_select %p1141, %s21, 1
        %s1143 = smul.addr %s1142, 8
        %s1144 = scalar_lea.vmem %s9, %s1143
      $region68: #{disc_opt_block_pallas.1} parent=63 // pred_fallthru
        _
    $region64: #{disc_opt_block_pallas.1} parent=5 // pred_fallthru
      _
  $region6: #{disc_opt_block_pallas.1} parent=0 // loop_footer
    %s19 = sadd.s32 1, %s15
  $region7: #{disc_opt_block_pallas.1} parent=0 // loop_footer_branch
    %14 = sbr.rel target = $region3
  $region8: #{disc_opt_block_pallas.1} parent=0 // loop_exit
    _

</llo_original>
